<compile_context>
chip_gen: v7x
topology: tpu7x:2x2x1
jax: 0.10.0
libtpu: 0.0.40
codegen_flags: <defaults>
</compile_context>

<pallas_src>
import numpy as np
import jax
import jax.numpy as jnp
from jax.experimental import pallas as pl
from jax.experimental.pallas import tpu as pltpu

LANES = 128


def _round_up(x, m):
    return ((x + m - 1) // m) * m


def _coord_axis(n):
    # torch.linspace(-1 + 1/n, 1 - 1/n, n) == start + i * step
    start = -1.0 + 1.0 / n
    step = (2.0 - 2.0 / n) / (n - 1) if n > 1 else 0.0
    return start, step


def nearest_exact_resize(x, out_h, out_w):
    # F.interpolate(mode='nearest-exact'): out[i] = in[floor((i + 0.5) * in / out)]
    in_h, in_w = x.shape[-2], x.shape[-1]
    iy = jnp.clip(jnp.floor((jnp.arange(out_h) + 0.5) * in_h / out_h).astype(jnp.int32),
                  0, in_h - 1)
    ix = jnp.clip(jnp.floor((jnp.arange(out_w) + 0.5) * in_w / out_w).astype(jnp.int32),
                  0, in_w - 1)
    return x[:, iy][:, :, ix]


def _flat_warp_grid(H, W, h_src, Rpad):
    """Host-side flattened source-pixel coordinates + padding-valid mask (f32)."""
    P = H * W
    f = np.arange(Rpad * LANES)
    iy = (f // W).astype(np.float32)
    ix = (f % W).astype(np.float32)
    sy, dy = _coord_axis(H)
    sx, dx = _coord_axis(W)
    x1n_x = np.float32(sx) + ix * np.float32(dx)
    x1n_y = np.float32(sy) + iy * np.float32(dy)
    x1x = (x1n_x + np.float32(1.0)) * np.float32(h_src - 1) * np.float32(0.5)
    x1y = (x1n_y + np.float32(1.0)) * np.float32(h_src - 1) * np.float32(0.5)
    valid = (f < P).astype(np.float32)
    shape = (Rpad, LANES)
    return (jnp.asarray(x1x.reshape(shape)), jnp.asarray(x1y.reshape(shape)),
            jnp.asarray(valid.reshape(shape)))


# --------------------------------------------------------------------------- #
# Pallas kernel: one scale of RobustLosses, tiled over (B, R_tiles)
# --------------------------------------------------------------------------- #
def _build_scale_kernel(N, TR, h_tgt, cs, alpha, it_weights, need_epe, has_lm,
                        has_pad):
    inv_tgt = 2.0 / (h_tgt - 1)
    cs2 = float(cs * cs)
    inv_cs2 = float(1.0 / (cs * cs))

    def kernel(*refs):
        it = iter(refs)
        hmat_ref = next(it)                       # SMEM (B, 9)
        x1x_ref = next(it)                        # (TR, 128) f32
        x1y_ref = next(it)
        valid_ref = next(it) if has_pad else None
        lm_ref = next(it) if has_lm else None
        flow_refs = [next(it) for _ in range(N)]  # (2, TR, 128) per iteration
        cert_refs = [next(it) for _ in range(N)]  # (TR, 128) per iteration
        sums_ref = next(it)                       # (3, 128) f32 accumulator
        epe_ref = next(it) if need_epe else None  # (TR, 128) f32

        b = pl.program_id(0)
        r = pl.program_id(1)

        # ---- homography warp of this tile of the flattened source grid --------
        h00 = hmat_ref[b, 0]; h01 = hmat_ref[b, 1]; h02 = hmat_ref[b, 2]
        h10 = hmat_ref[b, 3]; h11 = hmat_ref[b, 4]; h12 = hmat_ref[b, 5]
        h20 = hmat_ref[b, 6]; h21 = hmat_ref[b, 7]; h22 = hmat_ref[b, 8]

        x1x = x1x_ref[...]
        x1y = x1y_ref[...]

        xw = h00 * x1x + h01 * x1y + h02
        yw = h10 * x1x + h11 * x1y + h12
        zw = h20 * x1x + h21 * x1y + h22
        z_safe = jnp.where(jnp.abs(zw) > 1e-8, zw, 1.0)   # kornia homog. eps
        inv_z = 1.0 / z_safe                              # single divide
        x2nx = xw * inv_z * inv_tgt - 1.0
        x2ny = yw * inv_z * inv_tgt - 1.0

        inside = ((x2nx < 1.0) & (x2nx > -1.0) &
                  (x2ny < 1.0) & (x2ny > -1.0))
        if has_lm:
            # lm is zero on padded lanes (zero-padded in the wrapper).
            prob = jnp.where(inside, lm_ref[...].astype(jnp.float32), 0.0)
        elif has_pad:
            prob = jnp.where(inside, valid_ref[...], 0.0)
        else:
            prob = inside.astype(jnp.float32)
        msk = prob > 0.99

        # ---- fused iteration loop (static unroll; N is small) -----------------
        bce_acc = jnp.zeros((TR, LANES), jnp.float32)
        reg_acc = jnp.zeros((TR, LANES), jnp.float32)
        for k in range(N):
            fx = flow_refs[k][0].astype(jnp.float32)
            fy = flow_refs[k][1].astype(jnp.float32)
            dx = fx - x2nx
            dy = fy - x2ny
            d2 = dx * dx + dy * dy                        # no per-iter sqrt

            z = cert_refs[k][...].astype(jnp.float32)     # certainty logits
            bce = (jnp.maximum(z, 0.0) - z * prob +
                   jnp.log(1.0 + jnp.exp(-jnp.abs(z))))

            if alpha == 1.0:
                robust = jnp.sqrt(d2 + cs2)               # == cs*sqrt((epe/cs)^2+1)
            else:
                robust = (cs ** alpha) * jnp.exp(
                    (alpha * 0.5) * jnp.log(d2 * inv_cs2 + 1.0))

            w_k = it_weights[k]
            bce_acc = bce_acc + w_k * bce
            reg_acc = reg_acc + w_k * jnp.where(msk, robust, 0.0)

            if need_epe and k == N - 1:                   # only consumed EPE emitted
                epe_ref[...] = jnp.sqrt(d2)

        if has_pad:
            bce_acc = bce_acc * valid_ref[...]            # mask padded lanes

        # ---- sublane-only reductions -> one lane-dense (3, 128) accumulate ----
        ce_p = jnp.sum(bce_acc, axis=0, keepdims=True)    # (1, 128)
        reg_p = jnp.sum(reg_acc, axis=0, keepdims=True)
        cnt_p = jnp.sum(msk.astype(jnp.float32), axis=0, keepdims=True)
        rows = jax.lax.broadcasted_iota(jnp.int32, (3, LANES), 0)
        partial = jnp.where(rows == 0, ce_p, jnp.where(rows == 1, reg_p, cnt_p))

        @pl.when(r == 0)
        def _():
            sums_ref[...] = jnp.zeros_like(sums_ref)
        sums_ref[...] += partial

    return kernel


def _scale_loss_pallas(hmat_flat, h_src, h_tgt, h, w, flows, certs, lm_map,
                       it_weights, a, cs, need_epe, input_dtype, max_tile_rows):
    B = hmat_flat.shape[0]
    N = len(flows)
    P = h * w
    R = -(-P // LANES)
    TR = _round_up(min(max_tile_rows, R), 16)     # multiple of 16 (bf16 packing)
    RT = -(-R // TR)
    Rpad = RT * TR
    Ppad = Rpad * LANES
    has_pad = Ppad != P
    has_lm = lm_map is not None

    def flat_pad(x):
        # (..., h, w) -> lane-dense (..., Rpad, 128), zero padded.
        x = x.reshape(x.shape[:-2] + (P,))
        if Ppad != P:
            pad = [(0, 0)] * (x.ndim - 1) + [(0, Ppad - P)]
            x = jnp.pad(x, pad)
        return x.reshape(x.shape[:-1] + (Rpad, LANES))

    x1x, x1y, valid = _flat_warp_grid(h, w, h_src, Rpad)

    args = [hmat_flat, x1x, x1y]
    in_specs = [pl.BlockSpec(memory_space=pltpu.MemorySpace.SMEM),
                pl.BlockSpec((TR, LANES), lambda b, r: (r, 0)),
                pl.BlockSpec((TR, LANES), lambda b, r: (r, 0))]
    if has_pad:
        args.append(valid)
        in_specs.append(pl.BlockSpec((TR, LANES), lambda b, r: (r, 0)))
    if has_lm:
        args.append(flat_pad(lm_map.astype(input_dtype)))
        in_specs.append(pl.BlockSpec((None, TR, LANES), lambda b, r: (b, r, 0)))
    args += [flat_pad(f) for f in flows]                         # (B,2,Rpad,128)
    in_specs += [pl.BlockSpec((None, 2, TR, LANES), lambda b, r: (b, 0, r, 0))
                 for _ in range(N)]
    args += [flat_pad(c) for c in certs]                         # (B,Rpad,128)
    in_specs += [pl.BlockSpec((None, TR, LANES), lambda b, r: (b, r, 0))
                 for _ in range(N)]

    out_specs = [pl.BlockSpec((None, 3, LANES), lambda b, r: (b, 0, 0))]
    out_shape = [jax.ShapeDtypeStruct((B, 3, LANES), jnp.float32)]
    if need_epe:
        out_specs.append(pl.BlockSpec((None, TR, LANES), lambda b, r: (b, r, 0)))
        out_shape.append(jax.ShapeDtypeStruct((B, Rpad, LANES), jnp.float32))

    kernel = _build_scale_kernel(N, TR, h_tgt, cs, a, it_weights, need_epe,
                                 has_lm, has_pad)
    outs = pl.pallas_call(
        kernel,
        grid=(B, RT),
        in_specs=in_specs,
        out_specs=out_specs,
        out_shape=out_shape,
        compiler_params=pltpu.CompilerParams(
            # b-axis parallel (megacore); R-axis is a running accumulation.
            dimension_semantics=("parallel", "arbitrary"),
            # Safe on v5e/v6e (128 MiB) and under v7x's 64 MiB physical VMEM.
            vmem_limit_bytes=48 * 1024 * 1024),
    )(*args)

    sums = outs[0]
    ce_sum = jnp.sum(sums[:, 0, :])               # finish lane + batch reduction
    reg_sum = jnp.sum(sums[:, 1, :])
    cnt = jnp.sum(sums[:, 2, :])
    ce_loss = ce_sum / (B * h * w)                # BCE 'mean' reduction
    reg_loss = jnp.where(cnt > 0, reg_sum / jnp.maximum(cnt, 1.0), 0.0)
    epe = None
    if need_epe:
        epe = outs[1].reshape(B, Ppad)[:, :P].reshape(B, h, w)
    return ce_loss, reg_loss, epe


# --------------------------------------------------------------------------- #
# Pure-JAX warp + small-map fast path (per-step overhead would dominate Pallas)
# --------------------------------------------------------------------------- #
def _gt_warp_reference(H_s2t, h_src, h_tgt, B, H, W):
    sy, dy = _coord_axis(H)
    sx, dx = _coord_axis(W)
    iy = sy + jnp.arange(H, dtype=jnp.float32)[:, None] * dy
    ix = sx + jnp.arange(W, dtype=jnp.float32)[None, :] * dx
    x1n_x = jnp.broadcast_to(ix, (H, W))
    x1n_y = jnp.broadcast_to(iy, (H, W))
    x1x = (x1n_x + 1.0) * (h_src - 1) * 0.5
    x1y = (x1n_y + 1.0) * (h_src - 1) * 0.5

    def row(r):  # r: (B, 3)
        return (r[:, 0][:, None, None] * x1x[None] +
                r[:, 1][:, None, None] * x1y[None] +
                r[:, 2][:, None, None])

    xw, yw, zw = row(H_s2t[:, 0]), row(H_s2t[:, 1]), row(H_s2t[:, 2])
    z_safe = jnp.where(jnp.abs(zw) > 1e-8, zw, 1.0)
    inv_z = 1.0 / z_safe
    inv_tgt = 2.0 / (h_tgt - 1)
    x2n_x = xw * inv_z * inv_tgt - 1.0
    x2n_y = yw * inv_z * inv_tgt - 1.0
    inside = ((x2n_x < 1.0) & (x2n_x > -1.0) &
              (x2n_y < 1.0) & (x2n_y > -1.0)).astype(jnp.float32)
    return x2n_x, x2n_y, inside


def _scale_loss_jax(H_s2t, h_src, h_tgt, h, w, flows, certs, lm_map, it_weights,
                    a, cs, need_epe):
    B = H_s2t.shape[0]
    x2nx, x2ny, inside = _gt_warp_reference(H_s2t, h_src, h_tgt, B, h, w)
    prob = inside if lm_map is None else inside * lm_map.astype(jnp.float32)
    msk = prob > 0.99
    cnt = jnp.sum(msk.astype(jnp.float32))
    ce = jnp.float32(0.0)
    reg = jnp.float32(0.0)
    epe = None
    N = len(flows)
    for k in range(N):
        flow = flows[k].astype(jnp.float32)
        fx, fy = flow[:, 0], flow[:, 1]
        d2 = (fx - x2nx) ** 2 + (fy - x2ny) ** 2
        z = certs[k].astype(jnp.float32)
        bce = jnp.maximum(z, 0.0) - z * prob + jnp.log(1.0 + jnp.exp(-jnp.abs(z)))
        if a == 1.0:
            robust = jnp.sqrt(d2 + cs * cs)
        else:
            robust = (cs ** a) * (d2 / (cs * cs) + 1.0) ** (a * 0.5)
        ce = ce + it_weights[k] * jnp.sum(bce)
        reg = reg + it_weights[k] * jnp.sum(jnp.where(msk, robust, 0.0))
        if need_epe and k == N - 1:
            epe = jnp.sqrt(d2)
    ce_loss = ce / (B * h * w)
    reg_loss = jnp.where(cnt > 0, reg / jnp.maximum(cnt, 1.0), 0.0)
    return ce_loss, reg_loss, epe


# --------------------------------------------------------------------------- #
# Forward pass (Pallas-backed)
# --------------------------------------------------------------------------- #
def robust_losses_forward(corresps, batch, *, ce_weight=0.01, local_dist=None,
                          local_largest_scale=8, alpha=1.0, c=0.001,
                          iteration_base=0.85, input_dtype=jnp.bfloat16,
                          min_pallas_pixels=2048, max_tile_rows=256):
    H_s2t = jnp.asarray(batch['H_s2t'], jnp.float32)
    B = H_s2t.shape[0]
    h_src = batch['im_A'].shape[2]
    h_tgt = batch['im_B'].shape[2]
    hmat_flat = H_s2t.reshape(B, 9)
    scale_weights = {1: 1, 2: 1, 4: 1, 8: 1, 16: 1}

    scale_keys = list(corresps.keys())
    tot = jnp.float32(0.0)
    prev_epe = None
    for idx, scale_key in enumerate(scale_keys):
        sc = corresps[scale_key]
        itrs = sorted(sc.keys())
        N = len(itrs)
        _, _, h, w = sc[itrs[0]]['flow'].shape
        s = 16 if scale_key == 'gm' else int(scale_key)
        a = alpha[s] if isinstance(alpha, dict) else alpha
        cs = c * s
        it_weights = [float(iteration_base ** (N - k)) for k in itrs]

        # Does the (single) next scale consume this scale's EPE via the local gate?
        if idx + 1 < len(scale_keys):
            nxt = scale_keys[idx + 1]
            need_epe = (nxt != 'gm') and (local_largest_scale >= int(nxt))
        else:
            need_epe = False                               # dead writeback skipped

        # Local-distance gate from the previous (coarser) scale's EPE.
        if scale_key != 'gm' and local_largest_scale >= s:
            thr = 2.0 / 448.0 * (local_dist[s] * s)
            lm_map = nearest_exact_resize(prev_epe, h, w) < thr   # bool (B, h, w)
        else:
            lm_map = None

        # Per-iteration tensors; quantized once for DMA-byte savings (bf16).
        flows = [jnp.asarray(sc[k]['flow'], jnp.float32).astype(input_dtype)
                 for k in itrs]
        certs = [jnp.asarray(sc[k]['certainty'], jnp.float32)[:, 0].astype(input_dtype)
                 for k in itrs]

        P = h * w
        if P < min_pallas_pixels:
            ce_loss, reg_loss, epe_last = _scale_loss_jax(
                H_s2t, h_src, h_tgt, h, w, flows, certs, lm_map, it_weights, a,
                cs, need_epe)
        else:
            ce_loss, reg_loss, epe_last = _scale_loss_pallas(
                hmat_flat, h_src, h_tgt, h, w, flows, certs, lm_map, it_weights,
                a, cs, need_epe, input_dtype, max_tile_rows)

        tot = tot + scale_weights[s] * (ce_weight * ce_loss + reg_loss)
        prev_epe = epe_last if need_epe else None
    return tot


# --------------------------------------------------------------------------- #
# Pure-JAX reference (mirrors the PyTorch forward) for a sanity check
# --------------------------------------------------------------------------- #
def robust_losses_reference(corresps, batch, *, ce_weight=0.01, local_dist=None,
                            local_largest_scale=8, alpha=1.0, c=0.001,
                            iteration_base=0.85):
    H_s2t = jnp.asarray(batch['H_s2t'], jnp.float32)
    B = H_s2t.shape[0]
    h_src = batch['im_A'].shape[2]
    h_tgt = batch['im_B'].shape[2]
    scale_weights = {1: 1, 2: 1, 4: 1, 8: 1, 16: 1}
    tot = jnp.float32(0.0)
    prev_epe = None
    for scale_key in corresps:
        sc = corresps[scale_key]
        itrs = sorted(sc.keys())
        N = len(itrs)
        _, _, h, w = sc[itrs[0]]['flow'].shape
        s = 16 if scale_key == 'gm' else int(scale_key)
        x2n_x, x2n_y, prob = _gt_warp_reference(H_s2t, h_src, h_tgt, B, h, w)
        if scale_key != 'gm' and local_largest_scale >= s:
            thr = 2.0 / 448.0 * (local_dist[s] * s)
            prob = prob * (nearest_exact_resize(prev_epe, h, w) < thr).astype(jnp.float32)
        a = alpha[s] if isinstance(alpha, dict) else alpha
        cs = c * s
        msk = prob > 0.99
        cnt = jnp.sum(msk.astype(jnp.float32))
        ce_loss = jnp.float32(0.0)
        reg_sum = jnp.float32(0.0)
        epe = None
        for k in itrs:
            flow = jnp.asarray(sc[k]['flow'], jnp.float32)
            fx, fy = flow[:, 0], flow[:, 1]
            epe = jnp.sqrt((fx - x2n_x) ** 2 + (fy - x2n_y) ** 2)
            z = jnp.asarray(sc[k]['certainty'], jnp.float32)[:, 0]
            bce = jnp.mean(jnp.maximum(z, 0.0) - z * prob +
                           jnp.log(1.0 + jnp.exp(-jnp.abs(z))))
            wgt = iteration_base ** (N - k)
            ce_loss = ce_loss + wgt * bce
            base = (epe / cs) ** 2 + 1.0
            robust = cs * jnp.sqrt(base) if a == 1.0 else (cs ** a) * base ** (a / 2)
            reg_sum = reg_sum + wgt * jnp.sum(jnp.where(msk, robust, 0.0))
        reg_loss = jnp.where(cnt > 0, reg_sum / jnp.maximum(cnt, 1.0), 0.0)
        tot = tot + scale_weights[s] * (ce_weight * ce_loss + reg_loss)
        prev_epe = epe
    return tot


# --------------------------------------------------------------------------- #
if __name__ == "__main__":
    key = jax.random.PRNGKey(0)
    ks = jax.random.split(key, 12)
    B = 2
    HIMG = 112

    im_A = jnp.zeros((B, 3, HIMG, HIMG), jnp.float32)   # only shapes are used
    im_B = jnp.zeros((B, 3, HIMG, HIMG), jnp.float32)

    # Deterministic near-identity homographies (src -> tgt), one per batch element.
    H_s2t = jnp.array(
        [[[1.0,   0.02,  1.5],
          [-0.01, 1.0,  -0.8],
          [1e-4, -2e-4,  1.0]],
         [[1.0,  -0.03, -2.0],
          [0.02,  1.0,   1.2],
          [-1e-4, 3e-4,  1.0]]], dtype=jnp.float32)

    def uni(k, shape):
        return jax.random.uniform(k, shape, jnp.float32, -1.0, 1.0)

    def nrm(k, shape):
        return jax.random.normal(k, shape, jnp.float32)

    # gm: 7x7 (fast path), '2': 56x56 (Pallas, gated, emits EPE),
    # '1': 112x112 (Pallas, gated, multi R-tile accumulation).
    corresps = {
        'gm': {
            1: {'flow': uni(ks[0], (B, 2, 7, 7)), 'certainty': nrm(ks[1], (B, 1, 7, 7))},
            2: {'flow': uni(ks[2], (B, 2, 7, 7)), 'certainty': nrm(ks[3], (B, 1, 7, 7))},
        },
        '2': {
            1: {'flow': uni(ks[4], (B, 2, 56, 56)), 'certainty': nrm(ks[5], (B, 1, 56, 56))},
            2: {'flow': uni(ks[6], (B, 2, 56, 56)), 'certainty': nrm(ks[7], (B, 1, 56, 56))},
        },
        '1': {
            1: {'flow': uni(ks[8], (B, 2, 112, 112)), 'certainty': nrm(ks[9], (B, 1, 112, 112))},
            2: {'flow': uni(ks[10], (B, 2, 112, 112)), 'certainty': nrm(ks[11], (B, 1, 112, 112))},
        },
    }
    batch = {'H_s2t': H_s2t, 'im_A': im_A, 'im_B': im_B}
    # Thresholds loose enough that the robust (masked) branch is exercised too.
    local_dist = {1: 256, 2: 256, 4: 4, 8: 8}

    # max_tile_rows=32 so the 112x112 scale runs 4 R-tiles (exercises the
    # cross-tile accumulation path even at these small demo shapes).
    out = robust_losses_forward(corresps, batch, ce_weight=0.01,
                                local_dist=local_dist,
                                input_dtype=jnp.bfloat16,
                                min_pallas_pixels=2048,
                                max_tile_rows=32)
    out = jax.block_until_ready(out)

    # The kernel quantizes flow/certainty DMA traffic to bf16; compare against
    # the full-precision reference evaluated on the same bf16-rounded inputs.
    def _quantize(corresps, dtype):
        return {sk: {k: {'flow': d['flow'].astype(dtype).astype(jnp.float32),
                         'certainty': d['certainty'].astype(dtype).astype(jnp.float32)}
                     for k, d in sc.items()}
                for sk, sc in corresps.items()}

    ref = robust_losses_reference(_quantize(corresps, jnp.bfloat16), batch,
                                  ce_weight=0.01, local_dist=local_dist)
    ref = jax.block_until_ready(ref)

    assert np.isfinite(float(out)), float(out)
    assert np.allclose(float(out), float(ref), rtol=1.5e-3, atol=2e-4), \
        (float(out), float(ref))
    print("KERNEL_OK")
</pallas_src>

<mosaic_0001>
module attributes {stable_mosaic.version = 11 : i64} {
  func.func @kernel(%arg0: i32, %arg1: i32, %arg2: memref<2x9xf32, #tpu.memory_space<smem>>, %arg3: memref<32x128xf32, #tpu.memory_space<vmem>>, %arg4: memref<32x128xf32, #tpu.memory_space<vmem>>, %arg5: memref<32x128xf32, #tpu.memory_space<vmem>>, %arg6: memref<1x32x128xbf16, #tpu.memory_space<vmem>>, %arg7: memref<1x2x32x128xbf16, #tpu.memory_space<vmem>>, %arg8: memref<1x2x32x128xbf16, #tpu.memory_space<vmem>>, %arg9: memref<1x32x128xbf16, #tpu.memory_space<vmem>>, %arg10: memref<1x32x128xbf16, #tpu.memory_space<vmem>>, %arg11: memref<1x3x128xf32, #tpu.memory_space<vmem>>, %arg12: memref<1x32x128xf32, #tpu.memory_space<vmem>>) attributes {dimension_semantics = [#tpu.dimension_semantics<parallel>, #tpu.dimension_semantics<arbitrary>], iteration_bounds = array<i64: 2, 1>, scalar_prefetch = 0 : i64, scratch_operands = 0 : i64, tpu.core_type = #tpu.core_type<tc>, window_params = [{transform_indices = @transform_0, window_bounds = array<i64: 2, 9>}, {transform_indices = @transform_1, window_bounds = array<i64: 32, 128>}, {transform_indices = @transform_2, window_bounds = array<i64: 32, 128>}, {transform_indices = @transform_3, window_bounds = array<i64: 32, 128>}, {transform_indices = @transform_4, window_bounds = array<i64: 1, 32, 128>}, {transform_indices = @transform_5, window_bounds = array<i64: 1, 2, 32, 128>}, {transform_indices = @transform_6, window_bounds = array<i64: 1, 2, 32, 128>}, {transform_indices = @transform_7, window_bounds = array<i64: 1, 32, 128>}, {transform_indices = @transform_8, window_bounds = array<i64: 1, 32, 128>}, {transform_indices = @transform_9, window_bounds = array<i64: 1, 3, 128>}, {transform_indices = @transform_10, window_bounds = array<i64: 1, 32, 128>}]} {
    %0 = arith.index_cast %arg0 : i32 to index
    %c0 = arith.constant 0 : index
    %1 = memref.load %arg2[%0, %c0] : memref<2x9xf32, #tpu.memory_space<smem>>
    %2 = arith.index_cast %arg0 : i32 to index
    %c1 = arith.constant 1 : index
    %3 = memref.load %arg2[%2, %c1] : memref<2x9xf32, #tpu.memory_space<smem>>
    %4 = arith.index_cast %arg0 : i32 to index
    %c2 = arith.constant 2 : index
    %5 = memref.load %arg2[%4, %c2] : memref<2x9xf32, #tpu.memory_space<smem>>
    %6 = arith.index_cast %arg0 : i32 to index
    %c3 = arith.constant 3 : index
    %7 = memref.load %arg2[%6, %c3] : memref<2x9xf32, #tpu.memory_space<smem>>
    %8 = arith.index_cast %arg0 : i32 to index
    %c4 = arith.constant 4 : index
    %9 = memref.load %arg2[%8, %c4] : memref<2x9xf32, #tpu.memory_space<smem>>
    %10 = arith.index_cast %arg0 : i32 to index
    %c5 = arith.constant 5 : index
    %11 = memref.load %arg2[%10, %c5] : memref<2x9xf32, #tpu.memory_space<smem>>
    %12 = arith.index_cast %arg0 : i32 to index
    %c6 = arith.constant 6 : index
    %13 = memref.load %arg2[%12, %c6] : memref<2x9xf32, #tpu.memory_space<smem>>
    %14 = arith.index_cast %arg0 : i32 to index
    %c7 = arith.constant 7 : index
    %15 = memref.load %arg2[%14, %c7] : memref<2x9xf32, #tpu.memory_space<smem>>
    %16 = arith.index_cast %arg0 : i32 to index
    %c8 = arith.constant 8 : index
    %17 = memref.load %arg2[%16, %c8] : memref<2x9xf32, #tpu.memory_space<smem>>
    %c0_0 = arith.constant 0 : index
    %c0_1 = arith.constant 0 : index
    %18 = vector.load %arg3[%c0_0, %c0_1] : memref<32x128xf32, #tpu.memory_space<vmem>>, vector<32x128xf32>
    %c0_2 = arith.constant 0 : index
    %c0_3 = arith.constant 0 : index
    %19 = vector.load %arg4[%c0_2, %c0_3] : memref<32x128xf32, #tpu.memory_space<vmem>>, vector<32x128xf32>
    %20 = vector.broadcast %1 : f32 to vector<32x128xf32>
    %21 = arith.mulf %20, %18 : vector<32x128xf32>
    %22 = vector.broadcast %3 : f32 to vector<32x128xf32>
    %23 = arith.mulf %22, %19 : vector<32x128xf32>
    %24 = arith.addf %21, %23 : vector<32x128xf32>
    %25 = vector.broadcast %5 : f32 to vector<32x128xf32>
    %26 = arith.addf %24, %25 : vector<32x128xf32>
    %27 = vector.broadcast %7 : f32 to vector<32x128xf32>
    %28 = arith.mulf %27, %18 : vector<32x128xf32>
    %29 = vector.broadcast %9 : f32 to vector<32x128xf32>
    %30 = arith.mulf %29, %19 : vector<32x128xf32>
    %31 = arith.addf %28, %30 : vector<32x128xf32>
    %32 = vector.broadcast %11 : f32 to vector<32x128xf32>
    %33 = arith.addf %31, %32 : vector<32x128xf32>
    %34 = vector.broadcast %13 : f32 to vector<32x128xf32>
    %35 = arith.mulf %34, %18 : vector<32x128xf32>
    %36 = vector.broadcast %15 : f32 to vector<32x128xf32>
    %37 = arith.mulf %36, %19 : vector<32x128xf32>
    %38 = arith.addf %35, %37 : vector<32x128xf32>
    %39 = vector.broadcast %17 : f32 to vector<32x128xf32>
    %40 = arith.addf %38, %39 : vector<32x128xf32>
    %41 = math.absf %40 : vector<32x128xf32>
    %cst = arith.constant 9.99999993E-9 : f32
    %42 = vector.broadcast %cst : f32 to vector<32x128xf32>
    %43 = arith.cmpf ogt, %41, %42 : vector<32x128xf32>
    %cst_4 = arith.constant 1.000000e+00 : f32
    %44 = vector.broadcast %cst_4 : f32 to vector<32x128xf32>
    %45 = arith.select %43, %40, %44 : vector<32x128xi1>, vector<32x128xf32>
    %cst_5 = arith.constant 1.000000e+00 : f32
    %46 = vector.broadcast %cst_5 : f32 to vector<32x128xf32>
    %47 = arith.divf %46, %45 : vector<32x128xf32>
    %48 = arith.mulf %26, %47 : vector<32x128xf32>
    %cst_6 = arith.constant 0.0180180185 : f32
    %49 = vector.broadcast %cst_6 : f32 to vector<32x128xf32>
    %50 = arith.mulf %48, %49 : vector<32x128xf32>
    %cst_7 = arith.constant 1.000000e+00 : f32
    %51 = vector.broadcast %cst_7 : f32 to vector<32x128xf32>
    %52 = arith.subf %50, %51 : vector<32x128xf32>
    %53 = arith.mulf %33, %47 : vector<32x128xf32>
    %cst_8 = arith.constant 0.0180180185 : f32
    %54 = vector.broadcast %cst_8 : f32 to vector<32x128xf32>
    %55 = arith.mulf %53, %54 : vector<32x128xf32>
    %cst_9 = arith.constant 1.000000e+00 : f32
    %56 = vector.broadcast %cst_9 : f32 to vector<32x128xf32>
    %57 = arith.subf %55, %56 : vector<32x128xf32>
    %cst_10 = arith.constant 1.000000e+00 : f32
    %58 = vector.broadcast %cst_10 : f32 to vector<32x128xf32>
    %59 = arith.cmpf olt, %52, %58 : vector<32x128xf32>
    %cst_11 = arith.constant -1.000000e+00 : f32
    %60 = vector.broadcast %cst_11 : f32 to vector<32x128xf32>
    %61 = arith.cmpf ogt, %52, %60 : vector<32x128xf32>
    %62 = arith.andi %59, %61 : vector<32x128xi1>
    %cst_12 = arith.constant 1.000000e+00 : f32
    %63 = vector.broadcast %cst_12 : f32 to vector<32x128xf32>
    %64 = arith.cmpf olt, %57, %63 : vector<32x128xf32>
    %65 = arith.andi %62, %64 : vector<32x128xi1>
    %cst_13 = arith.constant -1.000000e+00 : f32
    %66 = vector.broadcast %cst_13 : f32 to vector<32x128xf32>
    %67 = arith.cmpf ogt, %57, %66 : vector<32x128xf32>
    %68 = arith.andi %65, %67 : vector<32x128xi1>
    %c0_14 = arith.constant 0 : index
    %c0_15 = arith.constant 0 : index
    %c0_16 = arith.constant 0 : index
    %69 = vector.load %arg6[%c0_14, %c0_15, %c0_16] : memref<1x32x128xbf16, #tpu.memory_space<vmem>>, vector<1x32x128xbf16>
    %70 = vector.shape_cast %69 : vector<1x32x128xbf16> to vector<32x128xbf16>
    %71 = arith.extf %70 : vector<32x128xbf16> to vector<32x128xf32>
    %cst_17 = arith.constant 0.000000e+00 : f32
    %72 = vector.broadcast %cst_17 : f32 to vector<32x128xf32>
    %73 = arith.select %68, %71, %72 : vector<32x128xi1>, vector<32x128xf32>
    %cst_18 = arith.constant 9.900000e-01 : f32
    %74 = vector.broadcast %cst_18 : f32 to vector<32x128xf32>
    %75 = arith.cmpf ogt, %73, %74 : vector<32x128xf32>
    %cst_19 = arith.constant 0.000000e+00 : f32
    %76 = vector.broadcast %cst_19 : f32 to vector<32x128xf32>
    %cst_20 = arith.constant 0.000000e+00 : f32
    %77 = vector.broadcast %cst_20 : f32 to vector<32x128xf32>
    %c0_21 = arith.constant 0 : index
    %c0_22 = arith.constant 0 : index
    %c0_23 = arith.constant 0 : index
    %c0_24 = arith.constant 0 : index
    %78 = vector.load %arg7[%c0_21, %c0_22, %c0_23, %c0_24] : memref<1x2x32x128xbf16, #tpu.memory_space<vmem>>, vector<1x1x32x128xbf16>
    %79 = vector.shape_cast %78 : vector<1x1x32x128xbf16> to vector<32x128xbf16>
    %80 = arith.extf %79 : vector<32x128xbf16> to vector<32x128xf32>
    %c0_25 = arith.constant 0 : index
    %c1_26 = arith.constant 1 : index
    %c0_27 = arith.constant 0 : index
    %c0_28 = arith.constant 0 : index
    %81 = vector.load %arg7[%c0_25, %c1_26, %c0_27, %c0_28] : memref<1x2x32x128xbf16, #tpu.memory_space<vmem>>, vector<1x1x32x128xbf16>
    %82 = vector.shape_cast %81 : vector<1x1x32x128xbf16> to vector<32x128xbf16>
    %83 = arith.extf %82 : vector<32x128xbf16> to vector<32x128xf32>
    %84 = arith.subf %80, %52 : vector<32x128xf32>
    %85 = arith.subf %83, %57 : vector<32x128xf32>
    %86 = arith.mulf %84, %84 : vector<32x128xf32>
    %87 = arith.mulf %85, %85 : vector<32x128xf32>
    %88 = arith.addf %86, %87 : vector<32x128xf32>
    %c0_29 = arith.constant 0 : index
    %c0_30 = arith.constant 0 : index
    %c0_31 = arith.constant 0 : index
    %89 = vector.load %arg9[%c0_29, %c0_30, %c0_31] : memref<1x32x128xbf16, #tpu.memory_space<vmem>>, vector<1x32x128xbf16>
    %90 = vector.shape_cast %89 : vector<1x32x128xbf16> to vector<32x128xbf16>
    %91 = arith.extf %90 : vector<32x128xbf16> to vector<32x128xf32>
    %cst_32 = arith.constant 0.000000e+00 : f32
    %92 = vector.broadcast %cst_32 : f32 to vector<32x128xf32>
    %93 = arith.maximumf %91, %92 : vector<32x128xf32>
    %94 = arith.mulf %91, %73 : vector<32x128xf32>
    %95 = arith.subf %93, %94 : vector<32x128xf32>
    %96 = math.absf %91 : vector<32x128xf32>
    %cst_33 = arith.constant 0.000000e+00 : f32
    %97 = vector.broadcast %cst_33 : f32 to vector<32x128xf32>
    %98 = arith.subf %97, %96 : vector<32x128xf32>
    %99 = math.exp %98 : vector<32x128xf32>
    %cst_34 = arith.constant 1.000000e+00 : f32
    %100 = vector.broadcast %cst_34 : f32 to vector<32x128xf32>
    %101 = arith.addf %100, %99 : vector<32x128xf32>
    %102 = math.log %101 : vector<32x128xf32>
    %103 = arith.addf %95, %102 : vector<32x128xf32>
    %cst_35 = arith.constant 4.000000e-06 : f32
    %104 = vector.broadcast %cst_35 : f32 to vector<32x128xf32>
    %105 = arith.addf %88, %104 : vector<32x128xf32>
    %106 = math.sqrt %105 : vector<32x128xf32>
    %cst_36 = arith.constant 8.500000e-01 : f32
    %107 = vector.broadcast %cst_36 : f32 to vector<32x128xf32>
    %108 = arith.mulf %107, %103 : vector<32x128xf32>
    %109 = arith.addf %76, %108 : vector<32x128xf32>
    %cst_37 = arith.constant 0.000000e+00 : f32
    %110 = vector.broadcast %cst_37 : f32 to vector<32x128xf32>
    %111 = arith.select %75, %106, %110 : vector<32x128xi1>, vector<32x128xf32>
    %cst_38 = arith.constant 8.500000e-01 : f32
    %112 = vector.broadcast %cst_38 : f32 to vector<32x128xf32>
    %113 = arith.mulf %112, %111 : vector<32x128xf32>
    %114 = arith.addf %77, %113 : vector<32x128xf32>
    %c0_39 = arith.constant 0 : index
    %c0_40 = arith.constant 0 : index
    %c0_41 = arith.constant 0 : index
    %c0_42 = arith.constant 0 : index
    %115 = vector.load %arg8[%c0_39, %c0_40, %c0_41, %c0_42] : memref<1x2x32x128xbf16, #tpu.memory_space<vmem>>, vector<1x1x32x128xbf16>
    %116 = vector.shape_cast %115 : vector<1x1x32x128xbf16> to vector<32x128xbf16>
    %117 = arith.extf %116 : vector<32x128xbf16> to vector<32x128xf32>
    %c0_43 = arith.constant 0 : index
    %c1_44 = arith.constant 1 : index
    %c0_45 = arith.constant 0 : index
    %c0_46 = arith.constant 0 : index
    %118 = vector.load %arg8[%c0_43, %c1_44, %c0_45, %c0_46] : memref<1x2x32x128xbf16, #tpu.memory_space<vmem>>, vector<1x1x32x128xbf16>
    %119 = vector.shape_cast %118 : vector<1x1x32x128xbf16> to vector<32x128xbf16>
    %120 = arith.extf %119 : vector<32x128xbf16> to vector<32x128xf32>
    %121 = arith.subf %117, %52 : vector<32x128xf32>
    %122 = arith.subf %120, %57 : vector<32x128xf32>
    %123 = arith.mulf %121, %121 : vector<32x128xf32>
    %124 = arith.mulf %122, %122 : vector<32x128xf32>
    %125 = arith.addf %123, %124 : vector<32x128xf32>
    %c0_47 = arith.constant 0 : index
    %c0_48 = arith.constant 0 : index
    %c0_49 = arith.constant 0 : index
    %126 = vector.load %arg10[%c0_47, %c0_48, %c0_49] : memref<1x32x128xbf16, #tpu.memory_space<vmem>>, vector<1x32x128xbf16>
    %127 = vector.shape_cast %126 : vector<1x32x128xbf16> to vector<32x128xbf16>
    %128 = arith.extf %127 : vector<32x128xbf16> to vector<32x128xf32>
    %cst_50 = arith.constant 0.000000e+00 : f32
    %129 = vector.broadcast %cst_50 : f32 to vector<32x128xf32>
    %130 = arith.maximumf %128, %129 : vector<32x128xf32>
    %131 = arith.mulf %128, %73 : vector<32x128xf32>
    %132 = arith.subf %130, %131 : vector<32x128xf32>
    %133 = math.absf %128 : vector<32x128xf32>
    %cst_51 = arith.constant 0.000000e+00 : f32
    %134 = vector.broadcast %cst_51 : f32 to vector<32x128xf32>
    %135 = arith.subf %134, %133 : vector<32x128xf32>
    %136 = math.exp %135 : vector<32x128xf32>
    %cst_52 = arith.constant 1.000000e+00 : f32
    %137 = vector.broadcast %cst_52 : f32 to vector<32x128xf32>
    %138 = arith.addf %137, %136 : vector<32x128xf32>
    %139 = math.log %138 : vector<32x128xf32>
    %140 = arith.addf %132, %139 : vector<32x128xf32>
    %cst_53 = arith.constant 4.000000e-06 : f32
    %141 = vector.broadcast %cst_53 : f32 to vector<32x128xf32>
    %142 = arith.addf %125, %141 : vector<32x128xf32>
    %143 = math.sqrt %142 : vector<32x128xf32>
    %cst_54 = arith.constant 1.000000e+00 : f32
    %144 = vector.broadcast %cst_54 : f32 to vector<32x128xf32>
    %145 = arith.mulf %144, %140 : vector<32x128xf32>
    %146 = arith.addf %109, %145 : vector<32x128xf32>
    %cst_55 = arith.constant 0.000000e+00 : f32
    %147 = vector.broadcast %cst_55 : f32 to vector<32x128xf32>
    %148 = arith.select %75, %143, %147 : vector<32x128xi1>, vector<32x128xf32>
    %cst_56 = arith.constant 1.000000e+00 : f32
    %149 = vector.broadcast %cst_56 : f32 to vector<32x128xf32>
    %150 = arith.mulf %149, %148 : vector<32x128xf32>
    %151 = arith.addf %114, %150 : vector<32x128xf32>
    %152 = math.sqrt %125 : vector<32x128xf32>
    %c0_57 = arith.constant 0 : index
    %c0_58 = arith.constant 0 : index
    %c0_59 = arith.constant 0 : index
    %153 = vector.load %arg12[%c0_57, %c0_58, %c0_59] : memref<1x32x128xf32, #tpu.memory_space<vmem>>, vector<1x32x128xf32>
    %154 = vector.shape_cast %153 : vector<1x32x128xf32> to vector<32x128xf32>
    %155 = vector.shape_cast %152 : vector<32x128xf32> to vector<1x32x128xf32>
    tpu.vector_store %arg12[%c0_57, %c0_58, %c0_59], %155 {strides = array<i32>} : memref<1x32x128xf32, #tpu.memory_space<vmem>>, vector<1x32x128xf32>,
    %c0_60 = arith.constant 0 : index
    %c0_61 = arith.constant 0 : index
    %156 = vector.load %arg5[%c0_60, %c0_61] : memref<32x128xf32, #tpu.memory_space<vmem>>, vector<32x128xf32>
    %157 = arith.mulf %146, %156 : vector<32x128xf32>
    %cst_62 = arith.constant dense<0.000000e+00> : vector<128xf32>
    %158 = vector.multi_reduction <add>, %157, %cst_62 [0] : vector<32x128xf32> to vector<128xf32>
    %159 = vector.shape_cast %158 : vector<128xf32> to vector<1x128xf32>
    %cst_63 = arith.constant dense<0.000000e+00> : vector<128xf32>
    %160 = vector.multi_reduction <add>, %151, %cst_63 [0] : vector<32x128xf32> to vector<128xf32>
    %161 = vector.shape_cast %160 : vector<128xf32> to vector<1x128xf32>
    %162 = arith.extui %75 : vector<32x128xi1> to vector<32x128xi32>
    %163 = arith.sitofp %162 : vector<32x128xi32> to vector<32x128xf32>
    %cst_64 = arith.constant dense<0.000000e+00> : vector<128xf32>
    %164 = vector.multi_reduction <add>, %163, %cst_64 [0] : vector<32x128xf32> to vector<128xf32>
    %165 = vector.shape_cast %164 : vector<128xf32> to vector<1x128xf32>
    %166 = tpu.iota {dimensions = array<i32: 0>} : vector<3x128xi32>
    %c0_i32 = arith.constant 0 : i32
    %167 = vector.broadcast %c0_i32 : i32 to vector<3x128xi32>
    %168 = arith.cmpi eq, %166, %167 : vector<3x128xi32>
    %c1_i32 = arith.constant 1 : i32
    %169 = vector.broadcast %c1_i32 : i32 to vector<3x128xi32>
    %170 = arith.cmpi eq, %166, %169 : vector<3x128xi32>
    %171 = vector.shape_cast %161 : vector<1x128xf32> to vector<1x128xf32>
    %172 = vector.broadcast %171 : vector<1x128xf32> to vector<3x128xf32>
    %173 = vector.shape_cast %165 : vector<1x128xf32> to vector<1x128xf32>
    %174 = vector.broadcast %173 : vector<1x128xf32> to vector<3x128xf32>
    %175 = arith.select %170, %172, %174 : vector<3x128xi1>, vector<3x128xf32>
    %176 = vector.shape_cast %159 : vector<1x128xf32> to vector<1x128xf32>
    %177 = vector.broadcast %176 : vector<1x128xf32> to vector<3x128xf32>
    %178 = arith.select %168, %177, %175 : vector<3x128xi1>, vector<3x128xf32>
    %c0_i32_65 = arith.constant 0 : i32
    %179 = arith.cmpi eq, %arg1, %c0_i32_65 : i32
    %180 = arith.extui %179 : i1 to i32
    %c0_i32_66 = arith.constant 0 : i32
    %181 = arith.cmpi ne, %180, %c0_i32_66 : i32
    scf.if %181 {
      %cst_73 = arith.constant 0.000000e+00 : f32
      %188 = vector.broadcast %cst_73 : f32 to vector<3x128xf32>
      %c0_74 = arith.constant 0 : index
      %c0_75 = arith.constant 0 : index
      %c0_76 = arith.constant 0 : index
      %189 = vector.load %arg11[%c0_74, %c0_75, %c0_76] : memref<1x3x128xf32, #tpu.memory_space<vmem>>, vector<1x3x128xf32>
      %190 = vector.shape_cast %189 : vector<1x3x128xf32> to vector<3x128xf32>
      %191 = vector.shape_cast %188 : vector<3x128xf32> to vector<1x3x128xf32>
      tpu.vector_store %arg11[%c0_74, %c0_75, %c0_76], %191 {strides = array<i32>} : memref<1x3x128xf32, #tpu.memory_space<vmem>>, vector<1x3x128xf32>,
    } else {
    }
    %c0_67 = arith.constant 0 : index
    %c0_68 = arith.constant 0 : index
    %c0_69 = arith.constant 0 : index
    %182 = vector.load %arg11[%c0_67, %c0_68, %c0_69] : memref<1x3x128xf32, #tpu.memory_space<vmem>>, vector<1x3x128xf32>
    %183 = vector.shape_cast %182 : vector<1x3x128xf32> to vector<3x128xf32>
    %184 = arith.addf %183, %178 : vector<3x128xf32>
    %c0_70 = arith.constant 0 : index
    %c0_71 = arith.constant 0 : index
    %c0_72 = arith.constant 0 : index
    %185 = vector.load %arg11[%c0_70, %c0_71, %c0_72] : memref<1x3x128xf32, #tpu.memory_space<vmem>>, vector<1x3x128xf32>
    %186 = vector.shape_cast %185 : vector<1x3x128xf32> to vector<3x128xf32>
    %187 = vector.shape_cast %184 : vector<3x128xf32> to vector<1x3x128xf32>
    tpu.vector_store %arg11[%c0_70, %c0_71, %c0_72], %187 {strides = array<i32>} : memref<1x3x128xf32, #tpu.memory_space<vmem>>, vector<1x3x128xf32>,
    return
  }
  func.func @transform_0(%arg0: i32, %arg1: i32) -> (i32, i32) {
    %c0_i32 = arith.constant 0 : i32
    %c0_i32_0 = arith.constant 0 : i32
    %c0_i32_1 = arith.constant 0 : i32
    return %c0_i32, %c0_i32_0 : i32, i32
  }
  func.func @transform_1(%arg0: i32, %arg1: i32) -> (i32, i32) {
    %c0_i32 = arith.constant 0 : i32
    %c0_i32_0 = arith.constant 0 : i32
    return %arg1, %c0_i32 : i32, i32
  }
  func.func @transform_2(%arg0: i32, %arg1: i32) -> (i32, i32) {
    %c0_i32 = arith.constant 0 : i32
    %c0_i32_0 = arith.constant 0 : i32
    return %arg1, %c0_i32 : i32, i32
  }
  func.func @transform_3(%arg0: i32, %arg1: i32) -> (i32, i32) {
    %c0_i32 = arith.constant 0 : i32
    %c0_i32_0 = arith.constant 0 : i32
    return %arg1, %c0_i32 : i32, i32
  }
  func.func @transform_4(%arg0: i32, %arg1: i32) -> (i32, i32, i32) {
    %c0_i32 = arith.constant 0 : i32
    %c0_i32_0 = arith.constant 0 : i32
    return %arg0, %arg1, %c0_i32 : i32, i32, i32
  }
  func.func @transform_5(%arg0: i32, %arg1: i32) -> (i32, i32, i32, i32) {
    %c0_i32 = arith.constant 0 : i32
    %c0_i32_0 = arith.constant 0 : i32
    %c0_i32_1 = arith.constant 0 : i32
    return %arg0, %c0_i32, %arg1, %c0_i32_0 : i32, i32, i32, i32
  }
  func.func @transform_6(%arg0: i32, %arg1: i32) -> (i32, i32, i32, i32) {
    %c0_i32 = arith.constant 0 : i32
    %c0_i32_0 = arith.constant 0 : i32
    %c0_i32_1 = arith.constant 0 : i32
    return %arg0, %c0_i32, %arg1, %c0_i32_0 : i32, i32, i32, i32
  }
  func.func @transform_7(%arg0: i32, %arg1: i32) -> (i32, i32, i32) {
    %c0_i32 = arith.constant 0 : i32
    %c0_i32_0 = arith.constant 0 : i32
    return %arg0, %arg1, %c0_i32 : i32, i32, i32
  }
  func.func @transform_8(%arg0: i32, %arg1: i32) -> (i32, i32, i32) {
    %c0_i32 = arith.constant 0 : i32
    %c0_i32_0 = arith.constant 0 : i32
    return %arg0, %arg1, %c0_i32 : i32, i32, i32
  }
  func.func @transform_9(%arg0: i32, %arg1: i32) -> (i32, i32, i32) {
    %c0_i32 = arith.constant 0 : i32
    %c0_i32_0 = arith.constant 0 : i32
    %c0_i32_1 = arith.constant 0 : i32
    return %arg0, %c0_i32, %c0_i32_0 : i32, i32, i32
  }
  func.func @transform_10(%arg0: i32, %arg1: i32) -> (i32, i32, i32) {
    %c0_i32 = arith.constant 0 : i32
    %c0_i32_0 = arith.constant 0 : i32
    return %arg0, %arg1, %c0_i32 : i32, i32, i32
  }
}

</mosaic_0001>

<llo_original>
// kernel: tpu_custom_call.1
$region0: #{tpu_custom_call.1}
  #allocation0 [shape = 'u32[]', space=smem, size = 0x4, offset = 0x4, fixed_abs, tag = 'smem constant byte address 0x4 - core index']
  #allocation1 [shape = 'u32[144,128]{1,0:T(1,128)}', space=vmem, size = 0x12000, scoped, tag = 'internal scratch']
  %s0 = inlined_call_operand.hbm [shape: f32[2,9], index: 0, kind: input, shape index: {}]
  %s1 = inlined_call_operand.hbm [shape: f32[32,128], index: 1, kind: input, shape index: {}]
  %s2 = inlined_call_operand.hbm [shape: f32[32,128], index: 2, kind: input, shape index: {}]
  %s3 = inlined_call_operand.hbm [shape: f32[32,128], index: 3, kind: input, shape index: {}]
  %s4 = inlined_call_operand.hbm [shape: bf16[2,32,128], index: 4, kind: input, shape index: {}]
  %s5 = inlined_call_operand.hbm [shape: bf16[2,2,32,128], index: 5, kind: input, shape index: {}]
  %s6 = inlined_call_operand.hbm [shape: bf16[2,2,32,128], index: 6, kind: input, shape index: {}]
  %s7 = inlined_call_operand.hbm [shape: bf16[2,32,128], index: 7, kind: input, shape index: {}]
  %s8 = inlined_call_operand.hbm [shape: bf16[2,32,128], index: 8, kind: input, shape index: {}]
  %s9 = inlined_call_operand.vmem [shape: f32[2,3,128], index: 9, kind: output, shape index: {0}]
  %s10 = inlined_call_operand.hbm [shape: f32[2,32,128], index: 10, kind: output, shape index: {1}]
  %11 = xla_tuple %s9, %s10
  %s12 = sld [smem:[#allocation0]]
  $region117: #{tpu_custom_call.1} parent=0
    _
  %s14 = ssub.s32 1, %s12
  %s15 = scalar_select 0, %s14, %s12
  $region1: #{tpu_custom_call.1} parent=0
    #allocation2 [shape = 'u8[1024]{0}', space=smem, size = 0x400, scoped, tag = 'input window, operand 0, single buffered']
    #allocation3 [shape = 's32[2]{0}', space=sflag, size = 0x8, scoped, tag = 'scoped memory for tpu_custom_call.1']
    #allocation4 [shape = 's32[2]{0}', space=sflag, size = 0x8, scoped, tag = 'scoped memory for tpu_custom_call.1']
    #allocation5 [shape = 's32[2]{0}', space=sflag, size = 0x8, scoped, tag = 'scoped memory for tpu_custom_call.1']
    #allocation6 [shape = 'u8[16384]{0}', space=vmem, size = 0x4000, scoped, tag = 'input window, operand 1, single buffered']
    #allocation7 [shape = 'u8[16384]{0}', space=vmem, size = 0x4000, scoped, tag = 'input window, operand 2, single buffered']
    #allocation8 [shape = 's32[1]{0}', space=sflag, size = 0x4, scoped, tag = 'scoped memory for tpu_custom_call.1']
    #allocation9 [shape = 'u8[16384]{0}', space=vmem, size = 0x4000, scoped, tag = 'input window, operand 3, single buffered']
    #allocation10 [shape = 'u8[16384]{0}', space=vmem, size = 0x4000, scoped, tag = 'input window, operand 4']
    #allocation11 [shape = 's32[2]{0}', space=sflag, size = 0x8, scoped, tag = 'scoped memory for tpu_custom_call.1']
    #allocation12 [shape = 'u8[32768]{0}', space=vmem, size = 0x8000, scoped, tag = 'input window, operand 5']
    #allocation13 [shape = 'u8[32768]{0}', space=vmem, size = 0x8000, scoped, tag = 'input window, operand 6']
    #allocation14 [shape = 's32[2]{0}', space=sflag, size = 0x8, scoped, tag = 'scoped memory for tpu_custom_call.1']
    #allocation15 [shape = 'u8[16384]{0}', space=vmem, size = 0x4000, scoped, tag = 'input window, operand 7']
    #allocation16 [shape = 'u8[16384]{0}', space=vmem, size = 0x4000, scoped, tag = 'input window, operand 8']
    #allocation17 [shape = 's32[2]{0}', space=sflag, size = 0x8, scoped, tag = 'scoped memory for tpu_custom_call.1']
    #allocation18 [shape = 'u8[32768]{0}', space=vmem, size = 0x8000, scoped, tag = 'output window, operand 1']
    %16 = vsyncpa [#allocation5], 0
    %17 = vsyncpa [#allocation3], 0
    %18 = vsyncpa [#allocation8], 0
    %19 = vsyncpa [#allocation11], 0
    %s20 = scalar_lea.sflag [#allocation11], 1
    %21 = vsyncpa %s20, 0
    %22 = vsyncpa [#allocation14], 0
    %s23 = scalar_lea.sflag [#allocation14], 1
    %24 = vsyncpa %s23, 0
    %25 = vsyncpa [#allocation17], 0
    %s26 = scalar_lea.sflag [#allocation17], 1
    %27 = vsyncpa %s26, 0
    %28 = vsyncpa [#allocation4], 0
    %s29 = scalar_lea.sflag [#allocation4], 1
    %30 = vsyncpa %s29, 0
    loop: start=0, step=1, limit=4
    $region2: #{tpu_custom_call.1} parent=1 // loop_pre_header
      _
    $region3: #{tpu_custom_call.1} parent=1 // loop_header
      %s32 = sphi 0, %s36
      %p33 = scmp.ge.s32.totalorder %s32, 4
      %s39 = sphi 0, %s51
      %s40 = sphi 0, %s47
      %s41 = sphi 0, %s39
      %s42 = sphi 0, %s40
      %s43 = sphi 0, %s41
      %s44 = sphi 0, %s42
      %s52 = sphi 0, %s52
      %s54 = sphi 0, %s52
      %s55 = sphi 0, %s54
      %s69 = sphi 0, %s55
      %s75 = sphi 0, %s77
      %s78 = sphi 0, %s75
      %s79 = sphi 0, %s78
      %s95 = sphi 0, %s79
      %s101 = sphi 0, %s103
      %s104 = sphi 0, %s101
      %s105 = sphi 0, %s104
      %s121 = sphi 0, %s105
      %s127 = sphi 0, %s129
      %s130 = sphi 0, %s127
      %s131 = sphi 0, %s130
      %s147 = sphi 0, %s131
      %s155 = sphi 0, %s157
      %s158 = sphi 0, %s155
      %s159 = sphi 0, %s158
      %s175 = sphi 0, %s159
      %s183 = sphi 0, %s185
      %s186 = sphi 0, %s183
      %s187 = sphi 0, %s186
      %s203 = sphi 0, %s187
      %s211 = sphi 0, %s213
      %s214 = sphi 0, %s211
      %s215 = sphi 0, %s214
      %s231 = sphi 0, %s215
      %s239 = sphi 0, %s241
      %s242 = sphi 0, %s239
      %s243 = sphi 0, %s242
      %s259 = sphi 0, %s243
      %s267 = sphi 0, %s269
      %s270 = sphi 0, %s267
      %s271 = sphi 0, %s270
      %s287 = sphi 0, %s271
      %s293 = sphi 0, %s295
      %s296 = sphi 0, %s293
      %s297 = sphi 0, %s296
      %s313 = sphi 0, %s297
      %s321 = sphi 0, %s323
      %s324 = sphi 0, %s321
      %s325 = sphi 0, %s324
      %s341 = sphi 0, %s325
    $region4: #{tpu_custom_call.1} parent=1 // loop_header_branch
      %35 = sbr.rel (%p33) target = $region8
    $region5: #{tpu_custom_call.1} parent=1 // loop_body
      %s37 = ssub.s32 %s32, 1
      %s38 = ssub.s32 %s32, 2
      %s45 = sadd.s32 1, %s40
      %p46 = scmp.ge.s32.totalorder %s45, 1
      %s47 = scalar_select %p46, 0, %s45
      %s48 = sadd.s32 1, %s39
      %s49 = scalar_select %p46, %s48, %s39
      %p50 = scmp.ge.s32.totalorder %s49, 2
      %s51 = scalar_select %p50, 0, %s49
      %s53 = sadd.s32 %s52, 1
      %p56 = scmp.eq.s32.totalorder %s32, 1
      %p57 = scmp.ne.s32.totalorder %s52, %s54
      %p58 = scmp.eq.s32.totalorder %s32, 0
      %p59 = por %p57, %p58
      %p60 = scmp.ne.s32.totalorder %s52, %s54
      %p61 = scmp.eq.s32.totalorder %s37, 1
      %p62 = por %p60, %p61
      %p63 = scmp.ne.s32.totalorder %s54, %s55
      %p64 = scmp.eq.s32.totalorder %s37, 0
      %p65 = por %p63, %p64
      %p66 = scmp.ne.s32.totalorder %s54, %s55
      %p67 = scmp.eq.s32.totalorder %s38, 1
      %p68 = por %p66, %p67
      %p70 = scmp.ne.s32.totalorder %s55, %s69
      %p71 = scmp.eq.s32.totalorder %s38, 0
      %p72 = por %p70, %p71
      %s73 = ssub.s32 %s40, %s47
      %p74 = scmp.eq.s32.totalorder %s73, 0
      %s76 = sadd.s32 %s75, 1
      %s77 = scalar_select %p74, %s75, %s76
      %p80 = pneg %p74
      %p81 = scmp.eq.s32.totalorder %s32, 1
      %p82 = por %p80, %p81
      %p83 = scmp.ne.s32.totalorder %s75, %s78
      %p84 = scmp.eq.s32.totalorder %s32, 0
      %p85 = por %p83, %p84
      %p86 = scmp.ne.s32.totalorder %s75, %s78
      %p87 = scmp.eq.s32.totalorder %s37, 1
      %p88 = por %p86, %p87
      %p89 = scmp.ne.s32.totalorder %s78, %s79
      %p90 = scmp.eq.s32.totalorder %s37, 0
      %p91 = por %p89, %p90
      %p92 = scmp.ne.s32.totalorder %s78, %s79
      %p93 = scmp.eq.s32.totalorder %s38, 1
      %p94 = por %p92, %p93
      %p96 = scmp.ne.s32.totalorder %s79, %s95
      %p97 = scmp.eq.s32.totalorder %s38, 0
      %p98 = por %p96, %p97
      %s99 = ssub.s32 %s40, %s47
      %p100 = scmp.eq.s32.totalorder %s99, 0
      %s102 = sadd.s32 %s101, 1
      %s103 = scalar_select %p100, %s101, %s102
      %p106 = pneg %p100
      %p107 = scmp.eq.s32.totalorder %s32, 1
      %p108 = por %p106, %p107
      %p109 = scmp.ne.s32.totalorder %s101, %s104
      %p110 = scmp.eq.s32.totalorder %s32, 0
      %p111 = por %p109, %p110
      %p112 = scmp.ne.s32.totalorder %s101, %s104
      %p113 = scmp.eq.s32.totalorder %s37, 1
      %p114 = por %p112, %p113
      %p115 = scmp.ne.s32.totalorder %s104, %s105
      %p116 = scmp.eq.s32.totalorder %s37, 0
      %p117 = por %p115, %p116
      %p118 = scmp.ne.s32.totalorder %s104, %s105
      %p119 = scmp.eq.s32.totalorder %s38, 1
      %p120 = por %p118, %p119
      %p122 = scmp.ne.s32.totalorder %s105, %s121
      %p123 = scmp.eq.s32.totalorder %s38, 0
      %p124 = por %p122, %p123
      %s125 = ssub.s32 %s40, %s47
      %p126 = scmp.eq.s32.totalorder %s125, 0
      %s128 = sadd.s32 %s127, 1
      %s129 = scalar_select %p126, %s127, %s128
      %p132 = pneg %p126
      %p133 = scmp.eq.s32.totalorder %s32, 1
      %p134 = por %p132, %p133
      %p135 = scmp.ne.s32.totalorder %s127, %s130
      %p136 = scmp.eq.s32.totalorder %s32, 0
      %p137 = por %p135, %p136
      %p138 = scmp.ne.s32.totalorder %s127, %s130
      %p139 = scmp.eq.s32.totalorder %s37, 1
      %p140 = por %p138, %p139
      %p141 = scmp.ne.s32.totalorder %s130, %s131
      %p142 = scmp.eq.s32.totalorder %s37, 0
      %p143 = por %p141, %p142
      %p144 = scmp.ne.s32.totalorder %s130, %s131
      %p145 = scmp.eq.s32.totalorder %s38, 1
      %p146 = por %p144, %p145
      %p148 = scmp.ne.s32.totalorder %s131, %s147
      %p149 = scmp.eq.s32.totalorder %s38, 0
      %p150 = por %p148, %p149
      %s151 = ssub.s32 %s39, %s51
      %s152 = ssub.s32 %s40, %s47
      %s153 = sor.u32 %s151, %s152
      %p154 = scmp.eq.s32.totalorder %s153, 0
      %s156 = sadd.s32 %s155, 1
      %s157 = scalar_select %p154, %s155, %s156
      %p160 = pneg %p154
      %p161 = scmp.eq.s32.totalorder %s32, 1
      %p162 = por %p160, %p161
      %p163 = scmp.ne.s32.totalorder %s155, %s158
      %p164 = scmp.eq.s32.totalorder %s32, 0
      %p165 = por %p163, %p164
      %p166 = scmp.ne.s32.totalorder %s155, %s158
      %p167 = scmp.eq.s32.totalorder %s37, 1
      %p168 = por %p166, %p167
      %p169 = scmp.ne.s32.totalorder %s158, %s159
      %p170 = scmp.eq.s32.totalorder %s37, 0
      %p171 = por %p169, %p170
      %p172 = scmp.ne.s32.totalorder %s158, %s159
      %p173 = scmp.eq.s32.totalorder %s38, 1
      %p174 = por %p172, %p173
      %p176 = scmp.ne.s32.totalorder %s159, %s175
      %p177 = scmp.eq.s32.totalorder %s38, 0
      %p178 = por %p176, %p177
      %s179 = ssub.s32 %s39, %s51
      %s180 = ssub.s32 %s40, %s47
      %s181 = sor.u32 %s179, %s180
      %p182 = scmp.eq.s32.totalorder %s181, 0
      %s184 = sadd.s32 %s183, 1
      %s185 = scalar_select %p182, %s183, %s184
      %p188 = pneg %p182
      %p189 = scmp.eq.s32.totalorder %s32, 1
      %p190 = por %p188, %p189
      %p191 = scmp.ne.s32.totalorder %s183, %s186
      %p192 = scmp.eq.s32.totalorder %s32, 0
      %p193 = por %p191, %p192
      %p194 = scmp.ne.s32.totalorder %s183, %s186
      %p195 = scmp.eq.s32.totalorder %s37, 1
      %p196 = por %p194, %p195
      %p197 = scmp.ne.s32.totalorder %s186, %s187
      %p198 = scmp.eq.s32.totalorder %s37, 0
      %p199 = por %p197, %p198
      %p200 = scmp.ne.s32.totalorder %s186, %s187
      %p201 = scmp.eq.s32.totalorder %s38, 1
      %p202 = por %p200, %p201
      %p204 = scmp.ne.s32.totalorder %s187, %s203
      %p205 = scmp.eq.s32.totalorder %s38, 0
      %p206 = por %p204, %p205
      %s207 = ssub.s32 %s39, %s51
      %s208 = ssub.s32 %s40, %s47
      %s209 = sor.u32 %s207, %s208
      %p210 = scmp.eq.s32.totalorder %s209, 0
      %s212 = sadd.s32 %s211, 1
      %s213 = scalar_select %p210, %s211, %s212
      %p216 = pneg %p210
      %p217 = scmp.eq.s32.totalorder %s32, 1
      %p218 = por %p216, %p217
      %p219 = scmp.ne.s32.totalorder %s211, %s214
      %p220 = scmp.eq.s32.totalorder %s32, 0
      %p221 = por %p219, %p220
      %p222 = scmp.ne.s32.totalorder %s211, %s214
      %p223 = scmp.eq.s32.totalorder %s37, 1
      %p224 = por %p222, %p223
      %p225 = scmp.ne.s32.totalorder %s214, %s215
      %p226 = scmp.eq.s32.totalorder %s37, 0
      %p227 = por %p225, %p226
      %p228 = scmp.ne.s32.totalorder %s214, %s215
      %p229 = scmp.eq.s32.totalorder %s38, 1
      %p230 = por %p228, %p229
      %p232 = scmp.ne.s32.totalorder %s215, %s231
      %p233 = scmp.eq.s32.totalorder %s38, 0
      %p234 = por %p232, %p233
      %s235 = ssub.s32 %s39, %s51
      %s236 = ssub.s32 %s40, %s47
      %s237 = sor.u32 %s235, %s236
      %p238 = scmp.eq.s32.totalorder %s237, 0
      %s240 = sadd.s32 %s239, 1
      %s241 = scalar_select %p238, %s239, %s240
      %p244 = pneg %p238
      %p245 = scmp.eq.s32.totalorder %s32, 1
      %p246 = por %p244, %p245
      %p247 = scmp.ne.s32.totalorder %s239, %s242
      %p248 = scmp.eq.s32.totalorder %s32, 0
      %p249 = por %p247, %p248
      %p250 = scmp.ne.s32.totalorder %s239, %s242
      %p251 = scmp.eq.s32.totalorder %s37, 1
      %p252 = por %p250, %p251
      %p253 = scmp.ne.s32.totalorder %s242, %s243
      %p254 = scmp.eq.s32.totalorder %s37, 0
      %p255 = por %p253, %p254
      %p256 = scmp.ne.s32.totalorder %s242, %s243
      %p257 = scmp.eq.s32.totalorder %s38, 1
      %p258 = por %p256, %p257
      %p260 = scmp.ne.s32.totalorder %s243, %s259
      %p261 = scmp.eq.s32.totalorder %s38, 0
      %p262 = por %p260, %p261
      %s263 = ssub.s32 %s39, %s51
      %s264 = ssub.s32 %s40, %s47
      %s265 = sor.u32 %s263, %s264
      %p266 = scmp.eq.s32.totalorder %s265, 0
      %s268 = sadd.s32 %s267, 1
      %s269 = scalar_select %p266, %s267, %s268
      %p272 = pneg %p266
      %p273 = scmp.eq.s32.totalorder %s32, 1
      %p274 = por %p272, %p273
      %p275 = scmp.ne.s32.totalorder %s267, %s270
      %p276 = scmp.eq.s32.totalorder %s32, 0
      %p277 = por %p275, %p276
      %p278 = scmp.ne.s32.totalorder %s267, %s270
      %p279 = scmp.eq.s32.totalorder %s37, 1
      %p280 = por %p278, %p279
      %p281 = scmp.ne.s32.totalorder %s270, %s271
      %p282 = scmp.eq.s32.totalorder %s37, 0
      %p283 = por %p281, %p282
      %p284 = scmp.ne.s32.totalorder %s270, %s271
      %p285 = scmp.eq.s32.totalorder %s38, 1
      %p286 = por %p284, %p285
      %p288 = scmp.ne.s32.totalorder %s271, %s287
      %p289 = scmp.eq.s32.totalorder %s38, 0
      %p290 = por %p288, %p289
      %s291 = ssub.s32 %s39, %s51
      %p292 = scmp.eq.s32.totalorder %s291, 0
      %s294 = sadd.s32 %s293, 1
      %s295 = scalar_select %p292, %s293, %s294
      %p298 = pneg %p292
      %p299 = scmp.eq.s32.totalorder %s32, 1
      %p300 = por %p298, %p299
      %p301 = scmp.ne.s32.totalorder %s293, %s296
      %p302 = scmp.eq.s32.totalorder %s32, 0
      %p303 = por %p301, %p302
      %p304 = scmp.ne.s32.totalorder %s293, %s296
      %p305 = scmp.eq.s32.totalorder %s37, 1
      %p306 = por %p304, %p305
      %p307 = scmp.ne.s32.totalorder %s296, %s297
      %p308 = scmp.eq.s32.totalorder %s37, 0
      %p309 = por %p307, %p308
      %p310 = scmp.ne.s32.totalorder %s296, %s297
      %p311 = scmp.eq.s32.totalorder %s38, 1
      %p312 = por %p310, %p311
      %p314 = scmp.ne.s32.totalorder %s297, %s313
      %p315 = scmp.eq.s32.totalorder %s38, 0
      %p316 = por %p314, %p315
      %s317 = ssub.s32 %s39, %s51
      %s318 = ssub.s32 %s40, %s47
      %s319 = sor.u32 %s317, %s318
      %p320 = scmp.eq.s32.totalorder %s319, 0
      %s322 = sadd.s32 %s321, 1
      %s323 = scalar_select %p320, %s321, %s322
      %p326 = pneg %p320
      %p327 = scmp.eq.s32.totalorder %s32, 1
      %p328 = por %p326, %p327
      %p329 = scmp.ne.s32.totalorder %s321, %s324
      %p330 = scmp.eq.s32.totalorder %s32, 0
      %p331 = por %p329, %p330
      %p332 = scmp.ne.s32.totalorder %s321, %s324
      %p333 = scmp.eq.s32.totalorder %s37, 1
      %p334 = por %p332, %p333
      %p335 = scmp.ne.s32.totalorder %s324, %s325
      %p336 = scmp.eq.s32.totalorder %s37, 0
      %p337 = por %p335, %p336
      %p338 = scmp.ne.s32.totalorder %s324, %s325
      %p339 = scmp.eq.s32.totalorder %s38, 1
      %p340 = por %p338, %p339
      %p342 = scmp.ne.s32.totalorder %s325, %s341
      %p343 = scmp.eq.s32.totalorder %s38, 0
      %p344 = por %p342, %p343
      %p345 = scmp.le.s32.totalorder 1, %s32
      %p346 = scmp.lt.s32.totalorder %s32, 3
      %p347 = pnand %p345, %p346
      %p348 = pneg %p347
      // Predicated region
      $region9: #{tpu_custom_call.1} parent=5 // pred_check
        _
      $region10: #{tpu_custom_call.1} parent=5 // pred_check_branch
        %350 = sbr.rel (%p347) target = $region12
      $region11: #{tpu_custom_call.1} parent=5 // pred_region
        %s351 = ssub.s32 %s32, 1
        // Predicated region
        $region13: #{tpu_custom_call.1} parent=11 // pred_check
          %p352 = pneg %p65
        $region14: #{tpu_custom_call.1} parent=11 // pred_check_branch
          %354 = sbr.rel (%p352) target = $region16
        $region15: #{tpu_custom_call.1} parent=11 // pred_region
          %s356 = ssub.s32 32, 32
          %357 = vsyncadd [#allocation5], %s356
          %360 = dma.hbm_to_smem %s0, 32, [#allocation2], [#allocation5]
        $region16: #{tpu_custom_call.1} parent=11 // pred_fallthru
          _
        // Predicated region
        $region17: #{tpu_custom_call.1} parent=11 // pred_check
          %p361 = pneg %p91
        $region18: #{tpu_custom_call.1} parent=11 // pred_check_branch
          %363 = sbr.rel (%p361) target = $region20
        $region19: #{tpu_custom_call.1} parent=11 // pred_region
          %s364 = smul.u32 4, %s42
          %s366 = ssub.s32 512, 512
          %367 = vsyncadd [#allocation3], %s366
          %s368 = smul.addr %s364, 128
          %s369 = scalar_lea.hbm %s1, %s368
          %s370 = sshll.u32 [#allocation6], 4
          %s371 = int_to_ptr.vmem [resolvable:$true] %s370
          %376 = dma.hbm_to_vmem [thread:$0]  %s369, 512, %s371, [#allocation3], 128, 128, 8
        $region20: #{tpu_custom_call.1} parent=11 // pred_fallthru
          _
        // Predicated region
        $region21: #{tpu_custom_call.1} parent=11 // pred_check
          %p377 = pneg %p117
        $region22: #{tpu_custom_call.1} parent=11 // pred_check_branch
          %379 = sbr.rel (%p377) target = $region24
        $region23: #{tpu_custom_call.1} parent=11 // pred_region
          %s380 = smul.u32 4, %s42
          %s382 = ssub.s32 512, 512
          %383 = vsyncadd [#allocation8], %s382
          %s384 = smul.addr %s380, 128
          %s385 = scalar_lea.hbm %s2, %s384
          %s386 = sshll.u32 [#allocation7], 4
          %s387 = int_to_ptr.vmem [resolvable:$true] %s386
          %392 = dma.hbm_to_vmem [thread:$0]  %s385, 512, %s387, [#allocation8], 128, 128, 8
        $region24: #{tpu_custom_call.1} parent=11 // pred_fallthru
          _
        // Predicated region
        $region25: #{tpu_custom_call.1} parent=11 // pred_check
          %p393 = pneg %p143
        $region26: #{tpu_custom_call.1} parent=11 // pred_check_branch
          %395 = sbr.rel (%p393) target = $region28
        $region27: #{tpu_custom_call.1} parent=11 // pred_region
          %s396 = smul.u32 4, %s42
          %s398 = ssub.s32 512, 512
          %399 = vsyncadd [#allocation8], %s398
          %s400 = smul.addr %s396, 128
          %s401 = scalar_lea.hbm %s3, %s400
          %s402 = sshll.u32 [#allocation9], 4
          %s403 = int_to_ptr.vmem [resolvable:$true] %s402
          %408 = dma.hbm_to_vmem [thread:$0]  %s401, 512, %s403, [#allocation8], 128, 128, 8
        $region28: #{tpu_custom_call.1} parent=11 // pred_fallthru
          _
      $region12: #{tpu_custom_call.1} parent=5 // pred_fallthru
        _
      %p409 = scmp.lt.s32.totalorder %s32, 2
      // Predicated region
      $region29: #{tpu_custom_call.1} parent=5 // pred_check
        %p410 = pneg %p409
      $region30: #{tpu_custom_call.1} parent=5 // pred_check_branch
        %412 = sbr.rel (%p410) target = $region32
      $region31: #{tpu_custom_call.1} parent=5 // pred_region
        // Predicated region
        $region33: #{tpu_custom_call.1} parent=31 // pred_check
          %p413 = pneg %p165
        $region34: #{tpu_custom_call.1} parent=31 // pred_check_branch
          %415 = sbr.rel (%p413) target = $region36
        $region35: #{tpu_custom_call.1} parent=31 // pred_region
          %s416 = sand.u32 %s32, 1
          %s417 = scalar_lea.sflag [#allocation11], %s416
          %s418 = sand.u32 %s155, 1
          %s419 = smul.addr %s418, 16
          %s420 = scalar_lea.vmem [#allocation10], %s419
          %s421 = smul.u32 4, %s40
          %s423 = ssub.s32 256, 256
          %424 = vsyncadd %s417, %s423
          %s425 = smul.addr %s39, 4
          %s426 = sadd.s32 %s421, %s425
          %s427 = smul.addr %s426, 64
          %s428 = scalar_lea.hbm %s4, %s427
          %s429 = sshll.u32 %s420, 4
          %s430 = int_to_ptr.vmem [resolvable:$true] %s429
          %435 = dma.hbm_to_vmem [thread:$0]  %s428, 256, %s430, %s417, 64, 64, 4
        $region36: #{tpu_custom_call.1} parent=31 // pred_fallthru
          _
        // Predicated region
        $region37: #{tpu_custom_call.1} parent=31 // pred_check
          %p436 = pneg %p193
        $region38: #{tpu_custom_call.1} parent=31 // pred_check_branch
          %438 = sbr.rel (%p436) target = $region40
        $region39: #{tpu_custom_call.1} parent=31 // pred_region
          %s439 = sand.u32 %s32, 1
          %s440 = scalar_lea.sflag [#allocation11], %s439
          %s441 = sand.u32 %s183, 1
          %s442 = smul.addr %s441, 32
          %s443 = scalar_lea.vmem [#allocation12], %s442
          %s444 = smul.u32 4, %s40
          %s446 = ssub.s32 512, 512
          %447 = vsyncadd %s440, %s446
          %s448 = smul.addr %s39, 8
          %s449 = sadd.s32 %s444, %s448
          %s450 = smul.addr %s449, 64
          %s451 = scalar_lea.hbm %s5, %s450
          %s452 = sshll.u32 %s443, 4
          %s453 = int_to_ptr.vmem [resolvable:$true] %s452
          %458 = dma.hbm_to_vmem [thread:$0]  %s451, 512, %s453, %s440, 64, 64, 4
        $region40: #{tpu_custom_call.1} parent=31 // pred_fallthru
          _
        // Predicated region
        $region41: #{tpu_custom_call.1} parent=31 // pred_check
          %p459 = pneg %p221
        $region42: #{tpu_custom_call.1} parent=31 // pred_check_branch
          %461 = sbr.rel (%p459) target = $region44
        $region43: #{tpu_custom_call.1} parent=31 // pred_region
          %s462 = sand.u32 %s32, 1
          %s463 = scalar_lea.sflag [#allocation14], %s462
          %s464 = sand.u32 %s211, 1
          %s465 = smul.addr %s464, 32
          %s466 = scalar_lea.vmem [#allocation13], %s465
          %s467 = smul.u32 4, %s40
          %s469 = ssub.s32 512, 512
          %470 = vsyncadd %s463, %s469
          %s471 = smul.addr %s39, 8
          %s472 = sadd.s32 %s467, %s471
          %s473 = smul.addr %s472, 64
          %s474 = scalar_lea.hbm %s6, %s473
          %s475 = sshll.u32 %s466, 4
          %s476 = int_to_ptr.vmem [resolvable:$true] %s475
          %481 = dma.hbm_to_vmem [thread:$0]  %s474, 512, %s476, %s463, 64, 64, 4
        $region44: #{tpu_custom_call.1} parent=31 // pred_fallthru
          _
        // Predicated region
        $region45: #{tpu_custom_call.1} parent=31 // pred_check
          %p482 = pneg %p249
        $region46: #{tpu_custom_call.1} parent=31 // pred_check_branch
          %484 = sbr.rel (%p482) target = $region48
        $region47: #{tpu_custom_call.1} parent=31 // pred_region
          %s485 = sand.u32 %s32, 1
          %s486 = scalar_lea.sflag [#allocation14], %s485
          %s487 = sand.u32 %s239, 1
          %s488 = smul.addr %s487, 16
          %s489 = scalar_lea.vmem [#allocation15], %s488
          %s490 = smul.u32 4, %s40
          %s492 = ssub.s32 256, 256
          %493 = vsyncadd %s486, %s492
          %s494 = smul.addr %s39, 4
          %s495 = sadd.s32 %s490, %s494
          %s496 = smul.addr %s495, 64
          %s497 = scalar_lea.hbm %s7, %s496
          %s498 = sshll.u32 %s489, 4
          %s499 = int_to_ptr.vmem [resolvable:$true] %s498
          %504 = dma.hbm_to_vmem [thread:$0]  %s497, 256, %s499, %s486, 64, 64, 4
        $region48: #{tpu_custom_call.1} parent=31 // pred_fallthru
          _
        // Predicated region
        $region49: #{tpu_custom_call.1} parent=31 // pred_check
          %p505 = pneg %p277
        $region50: #{tpu_custom_call.1} parent=31 // pred_check_branch
          %507 = sbr.rel (%p505) target = $region52
        $region51: #{tpu_custom_call.1} parent=31 // pred_region
          %s508 = sand.u32 %s267, 1
          %s509 = scalar_lea.sflag [#allocation17], %s508
          %s510 = sand.u32 %s267, 1
          %s511 = smul.addr %s510, 16
          %s512 = scalar_lea.vmem [#allocation16], %s511
          %s513 = smul.u32 4, %s40
          %s515 = ssub.s32 256, 256
          %516 = vsyncadd %s509, %s515
          %s517 = smul.addr %s39, 4
          %s518 = sadd.s32 %s513, %s517
          %s519 = smul.addr %s518, 64
          %s520 = scalar_lea.hbm %s8, %s519
          %s521 = sshll.u32 %s512, 4
          %s522 = int_to_ptr.vmem [resolvable:$true] %s521
          %527 = dma.hbm_to_vmem [thread:$0]  %s520, 256, %s522, %s509, 64, 64, 4
        $region52: #{tpu_custom_call.1} parent=31 // pred_fallthru
          _
      $region32: #{tpu_custom_call.1} parent=5 // pred_fallthru
        _
      %p528 = scmp.le.s32.totalorder 1, %s32
      %p529 = scmp.lt.s32.totalorder %s32, 3
      %p530 = pnand %p528, %p529
      %p531 = pneg %p530
      // Predicated region
      $region53: #{tpu_custom_call.1} parent=5 // pred_check
        _
      $region54: #{tpu_custom_call.1} parent=5 // pred_check_branch
        %533 = sbr.rel (%p530) target = $region56
      $region55: #{tpu_custom_call.1} parent=5 // pred_region
        %s534 = ssub.s32 %s32, 1
        // Predicated region
        $region57: #{tpu_custom_call.1} parent=55 // pred_check
          %p535 = pneg %p65
        $region58: #{tpu_custom_call.1} parent=55 // pred_check_branch
          %537 = sbr.rel (%p535) target = $region60
        $region59: #{tpu_custom_call.1} parent=55 // pred_region
          %538 = dma.done [#allocation5], 32
        $region60: #{tpu_custom_call.1} parent=55 // pred_fallthru
          _
        // Predicated region
        $region61: #{tpu_custom_call.1} parent=55 // pred_check
          %p539 = pneg %p91
        $region62: #{tpu_custom_call.1} parent=55 // pred_check_branch
          %541 = sbr.rel (%p539) target = $region64
        $region63: #{tpu_custom_call.1} parent=55 // pred_region
          %542 = dma.done [#allocation3], 512
        $region64: #{tpu_custom_call.1} parent=55 // pred_fallthru
          _
        // Predicated region
        $region65: #{tpu_custom_call.1} parent=55 // pred_check
          %p543 = pneg %p117
        $region66: #{tpu_custom_call.1} parent=55 // pred_check_branch
          %545 = sbr.rel (%p543) target = $region68
        $region67: #{tpu_custom_call.1} parent=55 // pred_region
          %546 = dma.done [#allocation8], 512
        $region68: #{tpu_custom_call.1} parent=55 // pred_fallthru
          _
        // Predicated region
        $region69: #{tpu_custom_call.1} parent=55 // pred_check
          %p547 = pneg %p143
        $region70: #{tpu_custom_call.1} parent=55 // pred_check_branch
          %549 = sbr.rel (%p547) target = $region72
        $region71: #{tpu_custom_call.1} parent=55 // pred_region
          %550 = dma.done [#allocation8], 512
        $region72: #{tpu_custom_call.1} parent=55 // pred_fallthru
          _
        %s551 = sand.u32 %s37, 1
        %s552 = scalar_lea.sflag [#allocation11], %s551
        %s553 = sand.u32 %s158, 1
        %s554 = smul.addr %s553, 16
        %s555 = scalar_lea.vmem [#allocation10], %s554
        // Predicated region
        $region73: #{tpu_custom_call.1} parent=55 // pred_check
          %p556 = pneg %p171
        $region74: #{tpu_custom_call.1} parent=55 // pred_check_branch
          %558 = sbr.rel (%p556) target = $region76
        $region75: #{tpu_custom_call.1} parent=55 // pred_region
          %559 = dma.done %s552, 256
        $region76: #{tpu_custom_call.1} parent=55 // pred_fallthru
          _
        %s560 = sand.u32 %s37, 1
        %s561 = scalar_lea.sflag [#allocation11], %s560
        %s562 = sand.u32 %s186, 1
        %s563 = smul.addr %s562, 32
        %s564 = scalar_lea.vmem [#allocation12], %s563
        // Predicated region
        $region77: #{tpu_custom_call.1} parent=55 // pred_check
          %p565 = pneg %p199
        $region78: #{tpu_custom_call.1} parent=55 // pred_check_branch
          %567 = sbr.rel (%p565) target = $region80
        $region79: #{tpu_custom_call.1} parent=55 // pred_region
          %568 = dma.done %s561, 512
        $region80: #{tpu_custom_call.1} parent=55 // pred_fallthru
          _
        %s569 = sand.u32 %s37, 1
        %s570 = scalar_lea.sflag [#allocation14], %s569
        %s571 = sand.u32 %s214, 1
        %s572 = smul.addr %s571, 32
        %s573 = scalar_lea.vmem [#allocation13], %s572
        // Predicated region
        $region81: #{tpu_custom_call.1} parent=55 // pred_check
          %p574 = pneg %p227
        $region82: #{tpu_custom_call.1} parent=55 // pred_check_branch
          %576 = sbr.rel (%p574) target = $region84
        $region83: #{tpu_custom_call.1} parent=55 // pred_region
          %577 = dma.done %s570, 512
        $region84: #{tpu_custom_call.1} parent=55 // pred_fallthru
          _
        %s578 = sand.u32 %s37, 1
        %s579 = scalar_lea.sflag [#allocation14], %s578
        %s580 = sand.u32 %s242, 1
        %s581 = smul.addr %s580, 16
        %s582 = scalar_lea.vmem [#allocation15], %s581
        // Predicated region
        $region85: #{tpu_custom_call.1} parent=55 // pred_check
          %p583 = pneg %p255
        $region86: #{tpu_custom_call.1} parent=55 // pred_check_branch
          %585 = sbr.rel (%p583) target = $region88
        $region87: #{tpu_custom_call.1} parent=55 // pred_region
          %586 = dma.done %s579, 256
        $region88: #{tpu_custom_call.1} parent=55 // pred_fallthru
          _
        %s587 = sand.u32 %s270, 1
        %s588 = scalar_lea.sflag [#allocation17], %s587
        %s589 = sand.u32 %s270, 1
        %s590 = smul.addr %s589, 16
        %s591 = scalar_lea.vmem [#allocation16], %s590
        // Predicated region
        $region89: #{tpu_custom_call.1} parent=55 // pred_check
          %p592 = pneg %p283
        $region90: #{tpu_custom_call.1} parent=55 // pred_check_branch
          %594 = sbr.rel (%p592) target = $region92
        $region91: #{tpu_custom_call.1} parent=55 // pred_region
          %595 = dma.done %s588, 256
        $region92: #{tpu_custom_call.1} parent=55 // pred_fallthru
          _
        %596 = sfence
        %p597 = pneg %p65
        %p598 = pneg %p62
        %p599 = pneg %p91
        %p600 = pneg %p88
        %p601 = pneg %p117
        %p602 = pneg %p114
        %p603 = pneg %p143
        %p604 = pneg %p140
        %s605 = sand.u32 %s37, 1
        %s606 = scalar_lea.sflag [#allocation11], %s605
        %s607 = sand.u32 %s158, 1
        %s608 = smul.addr %s607, 16
        %s609 = scalar_lea.vmem [#allocation10], %s608
        %p610 = pneg %p171
        %p611 = pneg %p168
        %s612 = sand.u32 %s37, 1
        %s613 = scalar_lea.sflag [#allocation11], %s612
        %s614 = sand.u32 %s186, 1
        %s615 = smul.addr %s614, 32
        %s616 = scalar_lea.vmem [#allocation12], %s615
        %p617 = pneg %p199
        %p618 = pneg %p196
        %s619 = sand.u32 %s37, 1
        %s620 = scalar_lea.sflag [#allocation14], %s619
        %s621 = sand.u32 %s214, 1
        %s622 = smul.addr %s621, 32
        %s623 = scalar_lea.vmem [#allocation13], %s622
        %p624 = pneg %p227
        %p625 = pneg %p224
        %s626 = sand.u32 %s37, 1
        %s627 = scalar_lea.sflag [#allocation14], %s626
        %s628 = sand.u32 %s242, 1
        %s629 = smul.addr %s628, 16
        %s630 = scalar_lea.vmem [#allocation15], %s629
        %p631 = pneg %p255
        %p632 = pneg %p252
        %s633 = sand.u32 %s270, 1
        %s634 = scalar_lea.sflag [#allocation17], %s633
        %s635 = sand.u32 %s270, 1
        %s636 = smul.addr %s635, 16
        %s637 = scalar_lea.vmem [#allocation16], %s636
        %p638 = pneg %p283
        %p639 = pneg %p280
        %p640 = pneg %p309
        %p641 = pneg %p306
        %p642 = scmp.lt.s32.totalorder %s41, 1
        %s643 = scalar_select %p642, %s41, 1
        %s644 = smul.addr %s643, 4
        %s645 = scalar_lea.vmem %s9, %s644
        %p646 = pneg %p337
        %p647 = pneg %p334
        %s648 = sand.u32 %s324, 1
        %s649 = scalar_lea.sflag [#allocation4], %s648
        %s650 = sand.u32 %s324, 1
        %s651 = smul.addr %s650, 32
        %s652 = scalar_lea.vmem [#allocation18], %s651
        %s653 = smul.u32 4, %s42
        %s654 = smul.u32 4, %s42
        %s655 = smul.u32 4, %s42
        %s656 = smul.u32 4, %s42
        %s657 = smul.u32 4, %s42
        %s658 = smul.u32 4, %s42
        %s659 = smul.u32 4, %s42
        %s660 = smul.u32 4, %s42
        %p661 = scmp.lt.s32.totalorder %s41, 1
        %s662 = scalar_select %p661, %s41, 1
        %s663 = smul.addr %s662, 4
        %s664 = scalar_lea.vmem %s9, %s663
        %s665 = smul.u32 4, %s42
        %s666 = smul.u32 %s41, 128
        %s667 = sld [smem:[#allocation2 + %s666]]
        %s668 = sadd.s32 %s666, 1
        %s669 = sld [smem:[#allocation2 + %s668]]
        %s670 = sadd.s32 %s666, 2
        %s671 = sld [smem:[#allocation2 + %s670]]
        %s672 = sadd.s32 %s666, 3
        %s673 = sld [smem:[#allocation2 + %s672]]
        %s674 = sadd.s32 %s666, 4
        %s675 = sld [smem:[#allocation2 + %s674]]
        %s676 = sadd.s32 %s666, 5
        %s677 = sld [smem:[#allocation2 + %s676]]
        %s678 = sadd.s32 %s666, 6
        %s679 = sld [smem:[#allocation2 + %s678]]
        %s680 = sadd.s32 %s666, 7
        %s681 = sld [smem:[#allocation2 + %s680]]
        %s682 = sadd.s32 %s666, 8
        %s683 = sld [smem:[#allocation2 + %s682]]
        %v684 = vld [vmem:[#allocation6] sm:$0xff]
        %v685 = vld [vmem:[#allocation6 + $0x8] sm:$0xff]
        %v686 = vld [vmem:[#allocation6 + $0x10] sm:$0xff]
        %v687 = vld [vmem:[#allocation6 + $0x18] sm:$0xff]
        %v688 = vld [vmem:[#allocation7] sm:$0xff]
        %v689 = vld [vmem:[#allocation7 + $0x8] sm:$0xff]
        %v690 = vld [vmem:[#allocation7 + $0x10] sm:$0xff]
        %v691 = vld [vmem:[#allocation7 + $0x18] sm:$0xff]
        %v692 = vstv %s667
        %v693 = vmul.f32 %v692, %v684
        %v694 = vmul.f32 %v692, %v685
        %v695 = vmul.f32 %v692, %v686
        %v696 = vmul.f32 %v692, %v687
        %v697 = vstv %s669
        %v698 = vmul.f32 %v697, %v688
        %v699 = vmul.f32 %v697, %v689
        %v700 = vmul.f32 %v697, %v690
        %v701 = vmul.f32 %v697, %v691
        %v702 = vadd.f32 %v693, %v698
        %v703 = vadd.f32 %v694, %v699
        %v704 = vadd.f32 %v695, %v700
        %v705 = vadd.f32 %v696, %v701
        %v706 = vstv %s671
        %v707 = vadd.f32 %v702, %v706
        %v708 = vadd.f32 %v703, %v706
        %v709 = vadd.f32 %v704, %v706
        %v710 = vadd.f32 %v705, %v706
        %v711 = vstv %s673
        %v712 = vmul.f32 %v711, %v684
        %v713 = vmul.f32 %v711, %v685
        %v714 = vmul.f32 %v711, %v686
        %v715 = vmul.f32 %v711, %v687
        %v716 = vstv %s675
        %v717 = vmul.f32 %v716, %v688
        %v718 = vmul.f32 %v716, %v689
        %v719 = vmul.f32 %v716, %v690
        %v720 = vmul.f32 %v716, %v691
        %v721 = vadd.f32 %v712, %v717
        %v722 = vadd.f32 %v713, %v718
        %v723 = vadd.f32 %v714, %v719
        %v724 = vadd.f32 %v715, %v720
        %v725 = vstv %s677
        %v726 = vadd.f32 %v721, %v725
        %v727 = vadd.f32 %v722, %v725
        %v728 = vadd.f32 %v723, %v725
        %v729 = vadd.f32 %v724, %v725
        %v730 = vstv %s679
        %v731 = vmul.f32 %v730, %v684
        %v732 = vmul.f32 %v730, %v685
        %v733 = vmul.f32 %v730, %v686
        %v734 = vmul.f32 %v730, %v687
        %v735 = vstv %s681
        %v736 = vmul.f32 %v735, %v688
        %v737 = vmul.f32 %v735, %v689
        %v738 = vmul.f32 %v735, %v690
        %v739 = vmul.f32 %v735, %v691
        %v740 = vadd.f32 %v731, %v736
        %v741 = vadd.f32 %v732, %v737
        %v742 = vadd.f32 %v733, %v738
        %v743 = vadd.f32 %v734, %v739
        %v744 = vstv %s683
        %v745 = vadd.f32 %v740, %v744
        %v746 = vadd.f32 %v741, %v744
        %v747 = vadd.f32 %v742, %v744
        %v748 = vadd.f32 %v743, %v744
        %v749 = vand.u32 2147483647, %v745
        %v750 = vand.u32 2147483647, %v746
        %v751 = vand.u32 2147483647, %v747
        %v752 = vand.u32 2147483647, %v748
        %vm753 = vcmp.gt.f32.partialorder %v749, 1e-08
        %vm754 = vcmp.gt.f32.partialorder %v750, 1e-08
        %vm755 = vcmp.gt.f32.partialorder %v751, 1e-08
        %vm756 = vcmp.gt.f32.partialorder %v752, 1e-08
        %v757 = vsel %vm753, %v745, 1.0
        %v758 = vsel %vm754, %v746, 1.0
        %v759 = vsel %vm755, %v747, 1.0
        %v760 = vsel %vm756, %v748, 1.0
        %v761 = vrcp.pop %v757
        %v762 = vmul.f32 1.0, %v761
        %v763 = vrcp.pop %v758
        %v764 = vmul.f32 1.0, %v763
        %v765 = vrcp.pop %v759
        %v766 = vmul.f32 1.0, %v765
        %v767 = vrcp.pop %v760
        %v768 = vmul.f32 1.0, %v767
        %v769 = vmul.f32 %v707, %v762
        %v770 = vmul.f32 %v708, %v764
        %v771 = vmul.f32 %v709, %v766
        %v772 = vmul.f32 %v710, %v768
        %v773 = vmul.f32 %v769, 0.018018018
        %v774 = vmul.f32 %v770, 0.018018018
        %v775 = vmul.f32 %v771, 0.018018018
        %v776 = vmul.f32 %v772, 0.018018018
        %v777 = vsub.f32 %v773, 1.0
        %v778 = vsub.f32 %v774, 1.0
        %v779 = vsub.f32 %v775, 1.0
        %v780 = vsub.f32 %v776, 1.0
        %v781 = vmul.f32 %v726, %v762
        %v782 = vmul.f32 %v727, %v764
        %v783 = vmul.f32 %v728, %v766
        %v784 = vmul.f32 %v729, %v768
        %v785 = vmul.f32 %v781, 0.018018018
        %v786 = vmul.f32 %v782, 0.018018018
        %v787 = vmul.f32 %v783, 0.018018018
        %v788 = vmul.f32 %v784, 0.018018018
        %v789 = vsub.f32 %v785, 1.0
        %v790 = vsub.f32 %v786, 1.0
        %v791 = vsub.f32 %v787, 1.0
        %v792 = vsub.f32 %v788, 1.0
        %vm793 = vcmp.lt.f32.partialorder %v777, 1.0
        %vm794 = vcmp.lt.f32.partialorder %v778, 1.0
        %vm795 = vcmp.lt.f32.partialorder %v779, 1.0
        %vm796 = vcmp.lt.f32.partialorder %v780, 1.0
        %vm797 = vcmp.gt.f32.partialorder %v777, -1.0
        %vm798 = vcmp.gt.f32.partialorder %v778, -1.0
        %vm799 = vcmp.gt.f32.partialorder %v779, -1.0
        %vm800 = vcmp.gt.f32.partialorder %v780, -1.0
        %vm801 = vmand %vm793, %vm797
        %vm802 = vmand %vm794, %vm798
        %vm803 = vmand %vm795, %vm799
        %vm804 = vmand %vm796, %vm800
        %vm805 = vcmp.lt.f32.partialorder %v789, 1.0
        %vm806 = vcmp.lt.f32.partialorder %v790, 1.0
        %vm807 = vcmp.lt.f32.partialorder %v791, 1.0
        %vm808 = vcmp.lt.f32.partialorder %v792, 1.0
        %vm809 = vmand %vm801, %vm805
        %vm810 = vmand %vm802, %vm806
        %vm811 = vmand %vm803, %vm807
        %vm812 = vmand %vm804, %vm808
        %vm813 = vcmp.gt.f32.partialorder %v789, -1.0
        %vm814 = vcmp.gt.f32.partialorder %v790, -1.0
        %vm815 = vcmp.gt.f32.partialorder %v791, -1.0
        %vm816 = vcmp.gt.f32.partialorder %v792, -1.0
        %vm817 = vmand %vm809, %vm813
        %vm818 = vmand %vm810, %vm814
        %vm819 = vmand %vm811, %vm815
        %vm820 = vmand %vm812, %vm816
        %v821 = vld [vmem:[%s555] sm:$0xf]
        %v822 = vld [vmem:[%s555 + $0x4] sm:$0xf]
        %v823 = vld [vmem:[%s555 + $0x8] sm:$0xf]
        %v824 = vld [vmem:[%s555 + $0xc] sm:$0xf]
        %v825 = vunpack.c.l.bf16 %v821
        %v826 = vunpack.c.l.bf16 %v822
        %v827 = vunpack.c.l.bf16 %v823
        %v828 = vunpack.c.l.bf16 %v824
        %v829 = vsel %vm817, %v825, 0.0
        %v830 = vsel %vm818, %v826, 0.0
        %v831 = vsel %vm819, %v827, 0.0
        %v832 = vsel %vm820, %v828, 0.0
        %vm833 = vcmp.gt.f32.partialorder %v829, 0.99
        %vm834 = vcmp.gt.f32.partialorder %v830, 0.99
        %vm835 = vcmp.gt.f32.partialorder %v831, 0.99
        %vm836 = vcmp.gt.f32.partialorder %v832, 0.99
        %v837 = vld [vmem:[%s564] sm:$0xf]
        %v838 = vld [vmem:[%s564 + $0x4] sm:$0xf]
        %v839 = vld [vmem:[%s564 + $0x8] sm:$0xf]
        %v840 = vld [vmem:[%s564 + $0xc] sm:$0xf]
        %v841 = vunpack.c.l.bf16 %v837
        %v842 = vunpack.c.l.bf16 %v838
        %v843 = vunpack.c.l.bf16 %v839
        %v844 = vunpack.c.l.bf16 %v840
        %s845 = scalar_lea.vmem %s564, 16 [#allocation12]
        %v846 = vld [vmem:[%s845] sm:$0xf]
        %v847 = vld [vmem:[%s845 + $0x4] sm:$0xf]
        %v848 = vld [vmem:[%s845 + $0x8] sm:$0xf]
        %v849 = vld [vmem:[%s845 + $0xc] sm:$0xf]
        %v850 = vunpack.c.l.bf16 %v846
        %v851 = vunpack.c.l.bf16 %v847
        %v852 = vunpack.c.l.bf16 %v848
        %v853 = vunpack.c.l.bf16 %v849
        %v854 = vsub.f32 %v841, %v777
        %v855 = vsub.f32 %v842, %v778
        %v856 = vsub.f32 %v843, %v779
        %v857 = vsub.f32 %v844, %v780
        %v858 = vsub.f32 %v850, %v789
        %v859 = vsub.f32 %v851, %v790
        %v860 = vsub.f32 %v852, %v791
        %v861 = vsub.f32 %v853, %v792
        %v862 = vmul.f32 %v854, %v854
        %v863 = vmul.f32 %v855, %v855
        %v864 = vmul.f32 %v856, %v856
        %v865 = vmul.f32 %v857, %v857
        %v866 = vmul.f32 %v858, %v858
        %v867 = vmul.f32 %v859, %v859
        %v868 = vmul.f32 %v860, %v860
        %v869 = vmul.f32 %v861, %v861
        %v870 = vadd.f32 %v862, %v866
        %v871 = vadd.f32 %v863, %v867
        %v872 = vadd.f32 %v864, %v868
        %v873 = vadd.f32 %v865, %v869
        %v874 = vld [vmem:[%s582] sm:$0xf]
        %v875 = vld [vmem:[%s582 + $0x4] sm:$0xf]
        %v876 = vld [vmem:[%s582 + $0x8] sm:$0xf]
        %v877 = vld [vmem:[%s582 + $0xc] sm:$0xf]
        %v878 = vunpack.c.l.bf16 %v874
        %v879 = vunpack.c.l.bf16 %v875
        %v880 = vunpack.c.l.bf16 %v876
        %v881 = vunpack.c.l.bf16 %v877
        %v882 = vmax.f32 %v878, 0.0
        %v883 = vmax.f32 %v879, 0.0
        %v884 = vmax.f32 %v880, 0.0
        %v885 = vmax.f32 %v881, 0.0
        %v886 = vmul.f32 %v878, %v829
        %v887 = vmul.f32 %v879, %v830
        %v888 = vmul.f32 %v880, %v831
        %v889 = vmul.f32 %v881, %v832
        %v890 = vsub.f32 %v882, %v886
        %v891 = vsub.f32 %v883, %v887
        %v892 = vsub.f32 %v884, %v888
        %v893 = vsub.f32 %v885, %v889
        %v894 = vand.u32 2147483647, %v878
        %v895 = vand.u32 2147483647, %v879
        %v896 = vand.u32 2147483647, %v880
        %v897 = vand.u32 2147483647, %v881
        %v898 = vsub.f32 0.0, %v894
        %v899 = vsub.f32 0.0, %v895
        %v900 = vsub.f32 0.0, %v896
        %v901 = vsub.f32 0.0, %v897
        %v902 = vmul.f32 %v898, 1.442695
        %v903 = vpow.pop %v902
        %v904 = vmul.f32 %v899, 1.442695
        %v905 = vpow.pop %v904
        %v906 = vmul.f32 %v900, 1.442695
        %v907 = vpow.pop %v906
        %v908 = vmul.f32 %v901, 1.442695
        %v909 = vpow.pop %v908
        %v910 = vadd.f32 %v903, 1.0
        %v911 = vadd.f32 %v905, 1.0
        %v912 = vadd.f32 %v907, 1.0
        %v913 = vadd.f32 %v909, 1.0
        %v914 = vlog2.pop %v910
        %v915 = vmul.f32 %v914, 0.6931472
        %v916 = vlog2.pop %v911
        %v917 = vmul.f32 %v916, 0.6931472
        %v918 = vlog2.pop %v912
        %v919 = vmul.f32 %v918, 0.6931472
        %v920 = vlog2.pop %v913
        %v921 = vmul.f32 %v920, 0.6931472
        %v922 = vadd.f32 %v890, %v915
        %v923 = vadd.f32 %v891, %v917
        %v924 = vadd.f32 %v892, %v919
        %v925 = vadd.f32 %v893, %v921
        %v926 = vadd.f32 %v870, 4e-06
        %v927 = vadd.f32 %v871, 4e-06
        %v928 = vadd.f32 %v872, 4e-06
        %v929 = vadd.f32 %v873, 4e-06
        %v930 = vrsqrt.pop %v926
        %v931 = vmul.f32 %v926, %v930
        %vm932 = vcmp.eq.f32.partialorder %v926, inf
        %v933 = vsel %vm932, %v926, %v931
        %vm934 = vcmp.eq.f32.partialorder %v926, 0.0
        %v935 = vand.u32 %v926, 2147483648
        %v936 = vsel %vm934, %v935, %v933
        %v937 = vrsqrt.pop %v927
        %v938 = vmul.f32 %v927, %v937
        %vm939 = vcmp.eq.f32.partialorder %v927, inf
        %v940 = vsel %vm939, %v927, %v938
        %vm941 = vcmp.eq.f32.partialorder %v927, 0.0
        %v942 = vand.u32 %v927, 2147483648
        %v943 = vsel %vm941, %v942, %v940
        %v944 = vrsqrt.pop %v928
        %v945 = vmul.f32 %v928, %v944
        %vm946 = vcmp.eq.f32.partialorder %v928, inf
        %v947 = vsel %vm946, %v928, %v945
        %vm948 = vcmp.eq.f32.partialorder %v928, 0.0
        %v949 = vand.u32 %v928, 2147483648
        %v950 = vsel %vm948, %v949, %v947
        %v951 = vrsqrt.pop %v929
        %v952 = vmul.f32 %v929, %v951
        %vm953 = vcmp.eq.f32.partialorder %v929, inf
        %v954 = vsel %vm953, %v929, %v952
        %vm955 = vcmp.eq.f32.partialorder %v929, 0.0
        %v956 = vand.u32 %v929, 2147483648
        %v957 = vsel %vm955, %v956, %v954
        %v958 = vmul.f32 %v922, 0.85
        %v959 = vmul.f32 %v923, 0.85
        %v960 = vmul.f32 %v924, 0.85
        %v961 = vmul.f32 %v925, 0.85
        %v962 = vadd.f32 %v958, 0.0
        %v963 = vadd.f32 %v959, 0.0
        %v964 = vadd.f32 %v960, 0.0
        %v965 = vadd.f32 %v961, 0.0
        %v966 = vsel %vm833, %v936, 0.0
        %v967 = vsel %vm834, %v943, 0.0
        %v968 = vsel %vm835, %v950, 0.0
        %v969 = vsel %vm836, %v957, 0.0
        %v970 = vmul.f32 %v966, 0.85
        %v971 = vmul.f32 %v967, 0.85
        %v972 = vmul.f32 %v968, 0.85
        %v973 = vmul.f32 %v969, 0.85
        %v974 = vadd.f32 %v970, 0.0
        %v975 = vadd.f32 %v971, 0.0
        %v976 = vadd.f32 %v972, 0.0
        %v977 = vadd.f32 %v973, 0.0
        %v978 = vld [vmem:[%s573] sm:$0xf]
        %v979 = vld [vmem:[%s573 + $0x4] sm:$0xf]
        %v980 = vld [vmem:[%s573 + $0x8] sm:$0xf]
        %v981 = vld [vmem:[%s573 + $0xc] sm:$0xf]
        %v982 = vunpack.c.l.bf16 %v978
        %v983 = vunpack.c.l.bf16 %v979
        %v984 = vunpack.c.l.bf16 %v980
        %v985 = vunpack.c.l.bf16 %v981
        %s986 = scalar_lea.vmem %s573, 16 [#allocation13]
        %v987 = vld [vmem:[%s986] sm:$0xf]
        %v988 = vld [vmem:[%s986 + $0x4] sm:$0xf]
        %v989 = vld [vmem:[%s986 + $0x8] sm:$0xf]
        %v990 = vld [vmem:[%s986 + $0xc] sm:$0xf]
        %v991 = vunpack.c.l.bf16 %v987
        %v992 = vunpack.c.l.bf16 %v988
        %v993 = vunpack.c.l.bf16 %v989
        %v994 = vunpack.c.l.bf16 %v990
        %v995 = vsub.f32 %v982, %v777
        %v996 = vsub.f32 %v983, %v778
        %v997 = vsub.f32 %v984, %v779
        %v998 = vsub.f32 %v985, %v780
        %v999 = vsub.f32 %v991, %v789
        %v1000 = vsub.f32 %v992, %v790
        %v1001 = vsub.f32 %v993, %v791
        %v1002 = vsub.f32 %v994, %v792
        %v1003 = vmul.f32 %v995, %v995
        %v1004 = vmul.f32 %v996, %v996
        %v1005 = vmul.f32 %v997, %v997
        %v1006 = vmul.f32 %v998, %v998
        %v1007 = vmul.f32 %v999, %v999
        %v1008 = vmul.f32 %v1000, %v1000
        %v1009 = vmul.f32 %v1001, %v1001
        %v1010 = vmul.f32 %v1002, %v1002
        %v1011 = vadd.f32 %v1003, %v1007
        %v1012 = vadd.f32 %v1004, %v1008
        %v1013 = vadd.f32 %v1005, %v1009
        %v1014 = vadd.f32 %v1006, %v1010
        %v1015 = vld [vmem:[%s591] sm:$0xf]
        %v1016 = vld [vmem:[%s591 + $0x4] sm:$0xf]
        %v1017 = vld [vmem:[%s591 + $0x8] sm:$0xf]
        %v1018 = vld [vmem:[%s591 + $0xc] sm:$0xf]
        %v1019 = vunpack.c.l.bf16 %v1015
        %v1020 = vunpack.c.l.bf16 %v1016
        %v1021 = vunpack.c.l.bf16 %v1017
        %v1022 = vunpack.c.l.bf16 %v1018
        %v1023 = vmax.f32 %v1019, 0.0
        %v1024 = vmax.f32 %v1020, 0.0
        %v1025 = vmax.f32 %v1021, 0.0
        %v1026 = vmax.f32 %v1022, 0.0
        %v1027 = vmul.f32 %v1019, %v829
        %v1028 = vmul.f32 %v1020, %v830
        %v1029 = vmul.f32 %v1021, %v831
        %v1030 = vmul.f32 %v1022, %v832
        %v1031 = vsub.f32 %v1023, %v1027
        %v1032 = vsub.f32 %v1024, %v1028
        %v1033 = vsub.f32 %v1025, %v1029
        %v1034 = vsub.f32 %v1026, %v1030
        %v1035 = vand.u32 2147483647, %v1019
        %v1036 = vand.u32 2147483647, %v1020
        %v1037 = vand.u32 2147483647, %v1021
        %v1038 = vand.u32 2147483647, %v1022
        %v1039 = vsub.f32 0.0, %v1035
        %v1040 = vsub.f32 0.0, %v1036
        %v1041 = vsub.f32 0.0, %v1037
        %v1042 = vsub.f32 0.0, %v1038
        %v1043 = vmul.f32 %v1039, 1.442695
        %v1044 = vpow.pop %v1043
        %v1045 = vmul.f32 %v1040, 1.442695
        %v1046 = vpow.pop %v1045
        %v1047 = vmul.f32 %v1041, 1.442695
        %v1048 = vpow.pop %v1047
        %v1049 = vmul.f32 %v1042, 1.442695
        %v1050 = vpow.pop %v1049
        %v1051 = vadd.f32 %v1044, 1.0
        %v1052 = vadd.f32 %v1046, 1.0
        %v1053 = vadd.f32 %v1048, 1.0
        %v1054 = vadd.f32 %v1050, 1.0
        %v1055 = vlog2.pop %v1051
        %v1056 = vmul.f32 %v1055, 0.6931472
        %v1057 = vlog2.pop %v1052
        %v1058 = vmul.f32 %v1057, 0.6931472
        %v1059 = vlog2.pop %v1053
        %v1060 = vmul.f32 %v1059, 0.6931472
        %v1061 = vlog2.pop %v1054
        %v1062 = vmul.f32 %v1061, 0.6931472
        %v1063 = vadd.f32 %v1031, %v1056
        %v1064 = vadd.f32 %v1032, %v1058
        %v1065 = vadd.f32 %v1033, %v1060
        %v1066 = vadd.f32 %v1034, %v1062
        %v1067 = vadd.f32 %v1011, 4e-06
        %v1068 = vadd.f32 %v1012, 4e-06
        %v1069 = vadd.f32 %v1013, 4e-06
        %v1070 = vadd.f32 %v1014, 4e-06
        %v1071 = vrsqrt.pop %v1067
        %v1072 = vmul.f32 %v1067, %v1071
        %vm1073 = vcmp.eq.f32.partialorder %v1067, inf
        %v1074 = vsel %vm1073, %v1067, %v1072
        %vm1075 = vcmp.eq.f32.partialorder %v1067, 0.0
        %v1076 = vand.u32 %v1067, 2147483648
        %v1077 = vsel %vm1075, %v1076, %v1074
        %v1078 = vrsqrt.pop %v1068
        %v1079 = vmul.f32 %v1068, %v1078
        %vm1080 = vcmp.eq.f32.partialorder %v1068, inf
        %v1081 = vsel %vm1080, %v1068, %v1079
        %vm1082 = vcmp.eq.f32.partialorder %v1068, 0.0
        %v1083 = vand.u32 %v1068, 2147483648
        %v1084 = vsel %vm1082, %v1083, %v1081
        %v1085 = vrsqrt.pop %v1069
        %v1086 = vmul.f32 %v1069, %v1085
        %vm1087 = vcmp.eq.f32.partialorder %v1069, inf
        %v1088 = vsel %vm1087, %v1069, %v1086
        %vm1089 = vcmp.eq.f32.partialorder %v1069, 0.0
        %v1090 = vand.u32 %v1069, 2147483648
        %v1091 = vsel %vm1089, %v1090, %v1088
        %v1092 = vrsqrt.pop %v1070
        %v1093 = vmul.f32 %v1070, %v1092
        %vm1094 = vcmp.eq.f32.partialorder %v1070, inf
        %v1095 = vsel %vm1094, %v1070, %v1093
        %vm1096 = vcmp.eq.f32.partialorder %v1070, 0.0
        %v1097 = vand.u32 %v1070, 2147483648
        %v1098 = vsel %vm1096, %v1097, %v1095
        %v1099 = vadd.f32 %v962, %v1063
        %v1100 = vadd.f32 %v963, %v1064
        %v1101 = vadd.f32 %v964, %v1065
        %v1102 = vadd.f32 %v965, %v1066
        %v1103 = vsel %vm833, %v1077, 0.0
        %v1104 = vsel %vm834, %v1084, 0.0
        %v1105 = vsel %vm835, %v1091, 0.0
        %v1106 = vsel %vm836, %v1098, 0.0
        %v1107 = vadd.f32 %v974, %v1103
        %v1108 = vadd.f32 %v975, %v1104
        %v1109 = vadd.f32 %v976, %v1105
        %v1110 = vadd.f32 %v977, %v1106
        %v1111 = vrsqrt.pop %v1011
        %v1112 = vmul.f32 %v1011, %v1111
        %vm1113 = vcmp.eq.f32.partialorder %v1011, inf
        %v1114 = vsel %vm1113, %v1011, %v1112
        %vm1115 = vcmp.eq.f32.partialorder %v1011, 0.0
        %v1116 = vand.u32 %v1011, 2147483648
        %v1117 = vsel %vm1115, %v1116, %v1114
        %v1118 = vrsqrt.pop %v1012
        %v1119 = vmul.f32 %v1012, %v1118
        %vm1120 = vcmp.eq.f32.partialorder %v1012, inf
        %v1121 = vsel %vm1120, %v1012, %v1119
        %vm1122 = vcmp.eq.f32.partialorder %v1012, 0.0
        %v1123 = vand.u32 %v1012, 2147483648
        %v1124 = vsel %vm1122, %v1123, %v1121
        %v1125 = vrsqrt.pop %v1013
        %v1126 = vmul.f32 %v1013, %v1125
        %vm1127 = vcmp.eq.f32.partialorder %v1013, inf
        %v1128 = vsel %vm1127, %v1013, %v1126
        %vm1129 = vcmp.eq.f32.partialorder %v1013, 0.0
        %v1130 = vand.u32 %v1013, 2147483648
        %v1131 = vsel %vm1129, %v1130, %v1128
        %v1132 = vrsqrt.pop %v1014
        %v1133 = vmul.f32 %v1014, %v1132
        %vm1134 = vcmp.eq.f32.partialorder %v1014, inf
        %v1135 = vsel %vm1134, %v1014, %v1133
        %vm1136 = vcmp.eq.f32.partialorder %v1014, 0.0
        %v1137 = vand.u32 %v1014, 2147483648
        %v1138 = vsel %vm1136, %v1137, %v1135
        %1139 = vst [vmem:[%s652] sm:$0xff] %v1117
        %1140 = vst [vmem:[%s652 + $0x8] sm:$0xff] %v1124
        %1141 = vst [vmem:[%s652 + $0x10] sm:$0xff] %v1131
        %1142 = vst [vmem:[%s652 + $0x18] sm:$0xff] %v1138
        %v1143 = vld [vmem:[#allocation9] sm:$0xff]
        %v1144 = vld [vmem:[#allocation9 + $0x8] sm:$0xff]
        %v1145 = vld [vmem:[#allocation9 + $0x10] sm:$0xff]
        %v1146 = vld [vmem:[#allocation9 + $0x18] sm:$0xff]
        %v1147 = vmul.f32 %v1099, %v1143
        %v1148 = vmul.f32 %v1100, %v1144
        %v1149 = vmul.f32 %v1101, %v1145
        %v1150 = vmul.f32 %v1102, %v1146
        %v1151 = vadd.f32 %v1147, %v1148
        %v1152 = vadd.f32 %v1151, %v1149
        %v1153 = vadd.f32 %v1152, %v1150
        %v1154 = vrot.slane %v1153, 4
        %v1155 = vadd.f32 %v1153, %v1154
        %v1156 = vrot.slane %v1155, 2
        %v1157 = vadd.f32 %v1155, %v1156
        %v1158 = vrot.slane %v1157, 1
        %v1159 = vadd.f32 %v1157, %v1158
        %v1160 = vadd.f32 %v1107, %v1108
        %v1161 = vadd.f32 %v1160, %v1109
        %v1162 = vadd.f32 %v1161, %v1110
        %v1163 = vrot.slane %v1162, 4
        %v1164 = vadd.f32 %v1162, %v1163
        %v1165 = vrot.slane %v1164, 2
        %v1166 = vadd.f32 %v1164, %v1165
        %v1167 = vrot.slane %v1166, 1
        %v1168 = vadd.f32 %v1166, %v1167
        %v1169 = vsel %vm833, 1, 0
        %v1170 = vsel %vm834, 1, 0
        %v1171 = vsel %vm835, 1, 0
        %v1172 = vsel %vm836, 1, 0
        %v1173 = vcvt.s32.f32 %v1169
        %v1174 = vcvt.s32.f32 %v1170
        %v1175 = vcvt.s32.f32 %v1171
        %v1176 = vcvt.s32.f32 %v1172
        %v1177 = vadd.f32 %v1173, %v1174
        %v1178 = vadd.f32 %v1177, %v1175
        %v1179 = vadd.f32 %v1178, %v1176
        %v1180 = vrot.slane %v1179, 4
        %v1181 = vadd.f32 %v1179, %v1180
        %v1182 = vrot.slane %v1181, 2
        %v1183 = vadd.f32 %v1181, %v1182
        %v1184 = vrot.slane %v1183, 1
        %v1185 = vadd.f32 %v1183, %v1184
        %v1186 = vlaneseq
        %v1187 = vshrl.u32 %v1186, 7
        %vm1188 = vcmp.eq.s32.totalorder %v1187, 0
        %vm1189 = vcmp.eq.s32.totalorder %v1187, 1
        %v1190 = vsel %vm1189, %v1168, %v1185
        %v1191 = vsel %vm1188, %v1159, %v1190
        %p1192 = scmp.eq.s32.totalorder %s42, 0
        // Predicated region
        $region93: #{tpu_custom_call.1} parent=55 // pred_check
          %p1193 = pneg %p1192
        $region94: #{tpu_custom_call.1} parent=55 // pred_check_branch
          %1195 = sbr.rel (%p1193) target = $region96
        $region95: #{tpu_custom_call.1} parent=55 // pred_region
          %1196 = vst [vmem:[%s664] sm:$0x7] 0.0
        $region96: #{tpu_custom_call.1} parent=55 // pred_fallthru
          _
        %v1197 = vld [vmem:[%s664] sm:$0x7]
        %v1198 = vadd.f32 %v1197, %v1191
        %1199 = vst [vmem:[%s664] sm:$0x7] %v1198
        %p1200 = scmp.lt.s32.totalorder %s41, 1
        %s1201 = scalar_select %p1200, %s41, 1
        %s1202 = smul.addr %s1201, 4
        %s1203 = scalar_lea.vmem %s9, %s1202
        %s1204 = sand.u32 %s324, 1
        %s1205 = scalar_lea.sflag [#allocation4], %s1204
        %s1206 = sand.u32 %s324, 1
        %s1207 = smul.addr %s1206, 32
        %s1208 = scalar_lea.vmem [#allocation18], %s1207
        // Predicated region
        $region97: #{tpu_custom_call.1} parent=55 // pred_check
          %p1209 = pneg %p306
        $region98: #{tpu_custom_call.1} parent=55 // pred_check_branch
          %1211 = sbr.rel (%p1209) target = $region100
        $region99: #{tpu_custom_call.1} parent=55 // pred_region
          _
        $region100: #{tpu_custom_call.1} parent=55 // pred_fallthru
          _
        // Predicated region
        $region101: #{tpu_custom_call.1} parent=55 // pred_check
          %p1212 = pneg %p334
        $region102: #{tpu_custom_call.1} parent=55 // pred_check_branch
          %1214 = sbr.rel (%p1212) target = $region104
        $region103: #{tpu_custom_call.1} parent=55 // pred_region
          %s1215 = smul.u32 4, %s42
          %s1217 = ssub.s32 512, 512
          %1218 = vsyncadd %s1205, %s1217
          %s1219 = smul.addr %s41, 4
          %s1220 = sadd.s32 %s1215, %s1219
          %s1221 = smul.addr %s1220, 128
          %s1222 = scalar_lea.hbm %s10, %s1221
          %s1223 = sshll.u32 %s1208, 4
          %s1224 = int_to_ptr.vmem [resolvable:$true] %s1223
          %1229 = dma.vmem_to_hbm [thread:$0]  %s1224, 512, %s1222, %s1205, 128, 128, 8
        $region104: #{tpu_custom_call.1} parent=55 // pred_fallthru
          _
      $region56: #{tpu_custom_call.1} parent=5 // pred_fallthru
        _
      %p1230 = scmp.le.s32.totalorder 2, %s32
      // Predicated region
      $region105: #{tpu_custom_call.1} parent=5 // pred_check
        %p1231 = pneg %p1230
      $region106: #{tpu_custom_call.1} parent=5 // pred_check_branch
        %1233 = sbr.rel (%p1231) target = $region108
      $region107: #{tpu_custom_call.1} parent=5 // pred_region
        %s1234 = ssub.s32 %s32, 2
        // Predicated region
        $region109: #{tpu_custom_call.1} parent=107 // pred_check
          %p1235 = pneg %p312
        $region110: #{tpu_custom_call.1} parent=107 // pred_check_branch
          %1237 = sbr.rel (%p1235) target = $region112
        $region111: #{tpu_custom_call.1} parent=107 // pred_region
          %p1238 = scmp.lt.s32.totalorder %s43, 1
          %s1239 = scalar_select %p1238, %s43, 1
          %s1240 = smul.addr %s1239, 4
          %s1241 = scalar_lea.vmem %s9, %s1240
        $region112: #{tpu_custom_call.1} parent=107 // pred_fallthru
          _
        // Predicated region
        $region113: #{tpu_custom_call.1} parent=107 // pred_check
          %p1242 = pneg %p340
        $region114: #{tpu_custom_call.1} parent=107 // pred_check_branch
          %1244 = sbr.rel (%p1242) target = $region116
        $region115: #{tpu_custom_call.1} parent=107 // pred_region
          %s1245 = sand.u32 %s325, 1
          %s1246 = scalar_lea.sflag [#allocation4], %s1245
          %s1247 = sand.u32 %s325, 1
          %s1248 = smul.addr %s1247, 32
          %s1249 = scalar_lea.vmem [#allocation18], %s1248
          %1250 = dma.done %s1246, 512
        $region116: #{tpu_custom_call.1} parent=107 // pred_fallthru
          _
      $region108: #{tpu_custom_call.1} parent=5 // pred_fallthru
        _
    $region6: #{tpu_custom_call.1} parent=1 // loop_footer
      %s36 = sadd.s32 1, %s32
    $region7: #{tpu_custom_call.1} parent=1 // loop_footer_branch
      %31 = sbr.rel target = $region3
    $region8: #{tpu_custom_call.1} parent=1 // loop_exit
      _
    %1251 = vsyncpa [#allocation3], 1
    %s1252 = scalar_lea.sflag [#allocation3], 1
    %1253 = vsyncpa %s1252, 1
    %1254 = vsyncpa [#allocation8], 1
    %1255 = vsyncpa [#allocation11], 1
    %s1256 = scalar_lea.sflag [#allocation11], 1
    %1257 = vsyncpa %s1256, 1
    %1258 = vsyncpa [#allocation14], 1
    %s1259 = scalar_lea.sflag [#allocation14], 1
    %1260 = vsyncpa %s1259, 1
    %1261 = vsyncpa [#allocation17], 1
    %s1262 = scalar_lea.sflag [#allocation17], 1
    %1263 = vsyncpa %s1262, 1
    %1264 = vsyncpa [#allocation4], 1
    %s1265 = scalar_lea.sflag [#allocation4], 1
    %1266 = vsyncpa %s1265, 1
    %1267 = vsyncpa [#allocation5], 1
    %s1268 = scalar_lea.sflag [#allocation5], 1
    %1269 = vsyncpa %s1268, 1

</llo_original>
